<compile_context>
chip_gen: v7x
topology: tpu7x:2x2x1
jax: 0.10.0
libtpu: 0.0.40
codegen_flags: <defaults>
</compile_context>

<pallas_src>
import functools

import jax
import jax.numpy as jnp
from jax.experimental import pallas as pl
from jax.experimental.pallas import tpu as pltpu

IN_DIM = 28 * 28      # 784
IN_PAD = 896          # 7 * 128, lane-aligned contraction dim for layer 1
HID = 512
OUT = 10
OUT_PAD = 128         # lane-dense logits slab; real logits are [:, :10]


def _round_up(x, m):
    return ((x + m - 1) // m) * m


def _mlp_kernel(x_ref, w1_ref, b1_ref, w2_ref, b2_ref, w3_ref, b3_ref, o_ref):
    # One fused MLP body per batch tile; weights stay VMEM-resident across the grid.
    x = x_ref[...]                                                            # (bb, 896) bf16
    h1 = jnp.dot(x, w1_ref[...], preferred_element_type=jnp.float32) + b1_ref[...]
    h1 = jnp.maximum(h1, 0.0).astype(jnp.bfloat16)                            # (bb, 512)
    h2 = jnp.dot(h1, w2_ref[...], preferred_element_type=jnp.float32) + b2_ref[...]
    h2 = jnp.maximum(h2, 0.0).astype(jnp.bfloat16)                            # (bb, 512)
    logits = jnp.dot(h2, w3_ref[...], preferred_element_type=jnp.float32) + b3_ref[...]
    o_ref[...] = logits.astype(o_ref.dtype)                                   # (bb, 128)


@jax.jit
def mlp_forward(x_nchw, prepared_params):
    """Forward pass. x_nchw: (B, 1, 28, 28) -> (B, 10) f32 logits."""
    w1, b1, w2, b2, w3, b3 = prepared_params
    B = x_nchw.shape[0]
    # Large-enough batch tile for MXU utilization; multiple of 8 (f32 sublanes),
    # capped at 512 so >=2 grid steps exist for realistic batches (v7x megacore).
    block_b = min(512, _round_up(B, 8))

    x = x_nchw.reshape(B, -1).astype(jnp.bfloat16)                 # nn.Flatten
    x = jnp.pad(x, ((0, 0), (0, IN_PAD - IN_DIM)))                 # K: 784 -> 896

    grid = (pl.cdiv(B, block_b),)
    full = lambda shape: pl.BlockSpec(shape, lambda i: (0,) * len(shape))

    out = pl.pallas_call(
        _mlp_kernel,
        out_shape=jax.ShapeDtypeStruct((B, OUT_PAD), jnp.float32),
        grid_spec=pltpu.PrefetchScalarGridSpec(
            num_scalar_prefetch=0,
            grid=grid,
            in_specs=[
                pl.BlockSpec((block_b, IN_PAD), lambda i: (i, 0)),
                full((IN_PAD, HID)),
                full((1, HID)),
                full((HID, HID)),
                full((1, HID)),
                full((HID, OUT_PAD)),
                full((1, OUT_PAD)),
            ],
            out_specs=pl.BlockSpec((block_b, OUT_PAD), lambda i: (i, 0)),
        ),
        compiler_params=pltpu.CompilerParams(
            dimension_semantics=("parallel",)),
    )(x, w1, b1, w2, b2, w3, b3)
    return out[:, :OUT]


def init_params(key):
    """f32 params mimicking nn.Linear default init; layout (in_features, out_features)."""
    def linear(k, fan_in, fan_out):
        kw, kb = jax.random.split(k)
        bound = 1.0 / jnp.sqrt(fan_in)
        w = jax.random.uniform(kw, (fan_in, fan_out), jnp.float32, -bound, bound)
        b = jax.random.uniform(kb, (1, fan_out), jnp.float32, -bound, bound)
        return w, b

    k1, k2, k3 = jax.random.split(key, 3)
    w1, b1 = linear(k1, IN_DIM, HID)
    w2, b2 = linear(k2, HID, HID)
    w3, b3 = linear(k3, HID, OUT)
    return (w1, b1, w2, b2, w3, b3)


def prepare_params(params):
    """One-time: cast weights to bf16 and pad to TPU-friendly shapes (biases stay f32)."""
    w1, b1, w2, b2, w3, b3 = params
    w1p = jnp.pad(w1, ((0, IN_PAD - IN_DIM), (0, 0))).astype(jnp.bfloat16)   # (896, 512)
    w2p = w2.astype(jnp.bfloat16)                                            # (512, 512)
    w3p = jnp.pad(w3, ((0, 0), (0, OUT_PAD - OUT))).astype(jnp.bfloat16)     # (512, 128)
    b3p = jnp.pad(b3, ((0, 0), (0, OUT_PAD - OUT)))                          # (1, 128)
    return (w1p, b1, w2p, b2, w3p, b3p)


def reference_forward_f32(x_nchw, params):
    w1, b1, w2, b2, w3, b3 = params
    x = x_nchw.reshape(x_nchw.shape[0], -1)
    h1 = jnp.maximum(x @ w1 + b1, 0.0)
    h2 = jnp.maximum(h1 @ w2 + b2, 0.0)
    return h2 @ w3 + b3


def reference_forward_bf16(x_nchw, params):
    """Pure-JAX reference that emulates the kernel numerics (bf16 inputs, f32 accum)."""
    w1, b1, w2, b2, w3, b3 = params
    q = lambda a: a.astype(jnp.bfloat16).astype(jnp.float32)
    x = q(x_nchw.reshape(x_nchw.shape[0], -1))
    h1 = q(jnp.maximum(x @ q(w1) + b1, 0.0))
    h2 = q(jnp.maximum(h1 @ q(w2) + b2, 0.0))
    return h2 @ q(w3) + b3


if __name__ == "__main__":
    key = jax.random.PRNGKey(0)
    kp, kx = jax.random.split(key)
    raw_params = init_params(kp)
    params = prepare_params(raw_params)

    B = 8
    x = jax.random.normal(kx, (B, 1, 28, 28), dtype=jnp.float32)   # NCHW like PyTorch

    out = mlp_forward(x, params)
    out = jax.block_until_ready(out)
    assert out.shape == (B, OUT)

    ref_bf16 = reference_forward_bf16(x, raw_params)
    assert jnp.allclose(out, ref_bf16, atol=1e-2, rtol=1e-2), \
        "mismatch vs bf16-emulating reference"

    ref_f32 = reference_forward_f32(x, raw_params)
    assert jnp.allclose(out, ref_f32, atol=1e-1, rtol=1e-1), \
        "mismatch vs f32 reference beyond expected bf16 quantization error"

    print("KERNEL_OK")
</pallas_src>

<mosaic_0001>
module attributes {stable_mosaic.version = 11 : i64} {
  func.func @_mlp_kernel(%arg0: i32, %arg1: memref<8x896xbf16, #tpu.memory_space<vmem>>, %arg2: memref<896x512xbf16, #tpu.memory_space<vmem>>, %arg3: memref<1x512xf32, #tpu.memory_space<vmem>>, %arg4: memref<512x512xbf16, #tpu.memory_space<vmem>>, %arg5: memref<1x512xf32, #tpu.memory_space<vmem>>, %arg6: memref<512x128xbf16, #tpu.memory_space<vmem>>, %arg7: memref<1x128xf32, #tpu.memory_space<vmem>>, %arg8: memref<8x128xf32, #tpu.memory_space<vmem>>) attributes {dimension_semantics = [#tpu.dimension_semantics<parallel>], iteration_bounds = array<i64: 1>, scalar_prefetch = 0 : i64, scratch_operands = 0 : i64, tpu.core_type = #tpu.core_type<tc>, window_params = [{transform_indices = @transform_0, window_bounds = array<i64: 8, 896>}, {pipeline_mode = #tpu.pipeline_mode<synchronous>, transform_indices = @transform_1, window_bounds = array<i64: 896, 512>}, {pipeline_mode = #tpu.pipeline_mode<synchronous>, transform_indices = @transform_2, window_bounds = array<i64: 1, 512>}, {pipeline_mode = #tpu.pipeline_mode<synchronous>, transform_indices = @transform_3, window_bounds = array<i64: 512, 512>}, {pipeline_mode = #tpu.pipeline_mode<synchronous>, transform_indices = @transform_4, window_bounds = array<i64: 1, 512>}, {pipeline_mode = #tpu.pipeline_mode<synchronous>, transform_indices = @transform_5, window_bounds = array<i64: 512, 128>}, {pipeline_mode = #tpu.pipeline_mode<synchronous>, transform_indices = @transform_6, window_bounds = array<i64: 1, 128>}, {transform_indices = @transform_7, window_bounds = array<i64: 8, 128>}]} {
    %c0 = arith.constant 0 : index
    %c0_0 = arith.constant 0 : index
    %0 = vector.load %arg1[%c0, %c0_0] : memref<8x896xbf16, #tpu.memory_space<vmem>>, vector<8x896xbf16>
    %c0_1 = arith.constant 0 : index
    %c0_2 = arith.constant 0 : index
    %1 = vector.load %arg2[%c0_1, %c0_2] : memref<896x512xbf16, #tpu.memory_space<vmem>>, vector<896x512xbf16>
    %cst = arith.constant dense<0.000000e+00> : vector<8x512xf32>
    %2 = tpu.matmul %0, %1, %cst {dimension_numbers = #tpu.dot_dimension_numbers<[1], [0], [0], [1], [0, 0, 1, 1], [], []>} : vector<8x896xbf16>, vector<896x512xbf16>, vector<8x512xf32> -> vector<8x512xf32>
    %c0_3 = arith.constant 0 : index
    %c0_4 = arith.constant 0 : index
    %3 = vector.load %arg3[%c0_3, %c0_4] : memref<1x512xf32, #tpu.memory_space<vmem>>, vector<1x512xf32>
    %4 = vector.broadcast %3 : vector<1x512xf32> to vector<8x512xf32>
    %5 = arith.addf %2, %4 : vector<8x512xf32>
    %cst_5 = arith.constant 0.000000e+00 : f32
    %6 = vector.broadcast %cst_5 : f32 to vector<8x512xf32>
    %7 = arith.maximumf %5, %6 : vector<8x512xf32>
    %8 = arith.truncf %7 : vector<8x512xf32> to vector<8x512xbf16>
    %c0_6 = arith.constant 0 : index
    %c0_7 = arith.constant 0 : index
    %9 = vector.load %arg4[%c0_6, %c0_7] : memref<512x512xbf16, #tpu.memory_space<vmem>>, vector<512x512xbf16>
    %cst_8 = arith.constant dense<0.000000e+00> : vector<8x512xf32>
    %10 = tpu.matmul %8, %9, %cst_8 {dimension_numbers = #tpu.dot_dimension_numbers<[1], [0], [0], [1], [0, 0, 1, 1], [], []>} : vector<8x512xbf16>, vector<512x512xbf16>, vector<8x512xf32> -> vector<8x512xf32>
    %c0_9 = arith.constant 0 : index
    %c0_10 = arith.constant 0 : index
    %11 = vector.load %arg5[%c0_9, %c0_10] : memref<1x512xf32, #tpu.memory_space<vmem>>, vector<1x512xf32>
    %12 = vector.broadcast %11 : vector<1x512xf32> to vector<8x512xf32>
    %13 = arith.addf %10, %12 : vector<8x512xf32>
    %cst_11 = arith.constant 0.000000e+00 : f32
    %14 = vector.broadcast %cst_11 : f32 to vector<8x512xf32>
    %15 = arith.maximumf %13, %14 : vector<8x512xf32>
    %16 = arith.truncf %15 : vector<8x512xf32> to vector<8x512xbf16>
    %c0_12 = arith.constant 0 : index
    %c0_13 = arith.constant 0 : index
    %17 = vector.load %arg6[%c0_12, %c0_13] : memref<512x128xbf16, #tpu.memory_space<vmem>>, vector<512x128xbf16>
    %cst_14 = arith.constant dense<0.000000e+00> : vector<8x128xf32>
    %18 = tpu.matmul %16, %17, %cst_14 {dimension_numbers = #tpu.dot_dimension_numbers<[1], [0], [0], [1], [0, 0, 1, 1], [], []>} : vector<8x512xbf16>, vector<512x128xbf16>, vector<8x128xf32> -> vector<8x128xf32>
    %c0_15 = arith.constant 0 : index
    %c0_16 = arith.constant 0 : index
    %19 = vector.load %arg7[%c0_15, %c0_16] : memref<1x128xf32, #tpu.memory_space<vmem>>, vector<1x128xf32>
    %20 = vector.broadcast %19 : vector<1x128xf32> to vector<8x128xf32>
    %21 = arith.addf %18, %20 : vector<8x128xf32>
    %c0_17 = arith.constant 0 : index
    %c0_18 = arith.constant 0 : index
    %22 = vector.load %arg8[%c0_17, %c0_18] : memref<8x128xf32, #tpu.memory_space<vmem>>, vector<8x128xf32>
    tpu.vector_store %arg8[%c0_17, %c0_18], %21 {strides = array<i32>} : memref<8x128xf32, #tpu.memory_space<vmem>>, vector<8x128xf32>,
    return
  }
  func.func @transform_0(%arg0: i32) -> (i32, i32) {
    %c0_i32 = arith.constant 0 : i32
    %c0_i32_0 = arith.constant 0 : i32
    return %arg0, %c0_i32 : i32, i32
  }
  func.func @transform_1(%arg0: i32) -> (i32, i32) {
    %c0_i32 = arith.constant 0 : i32
    %c0_i32_0 = arith.constant 0 : i32
    %c0_i32_1 = arith.constant 0 : i32
    return %c0_i32, %c0_i32_0 : i32, i32
  }
  func.func @transform_2(%arg0: i32) -> (i32, i32) {
    %c0_i32 = arith.constant 0 : i32
    %c0_i32_0 = arith.constant 0 : i32
    %c0_i32_1 = arith.constant 0 : i32
    return %c0_i32, %c0_i32_0 : i32, i32
  }
  func.func @transform_3(%arg0: i32) -> (i32, i32) {
    %c0_i32 = arith.constant 0 : i32
    %c0_i32_0 = arith.constant 0 : i32
    %c0_i32_1 = arith.constant 0 : i32
    return %c0_i32, %c0_i32_0 : i32, i32
  }
  func.func @transform_4(%arg0: i32) -> (i32, i32) {
    %c0_i32 = arith.constant 0 : i32
    %c0_i32_0 = arith.constant 0 : i32
    %c0_i32_1 = arith.constant 0 : i32
    return %c0_i32, %c0_i32_0 : i32, i32
  }
  func.func @transform_5(%arg0: i32) -> (i32, i32) {
    %c0_i32 = arith.constant 0 : i32
    %c0_i32_0 = arith.constant 0 : i32
    %c0_i32_1 = arith.constant 0 : i32
    return %c0_i32, %c0_i32_0 : i32, i32
  }
  func.func @transform_6(%arg0: i32) -> (i32, i32) {
    %c0_i32 = arith.constant 0 : i32
    %c0_i32_0 = arith.constant 0 : i32
    %c0_i32_1 = arith.constant 0 : i32
    return %c0_i32, %c0_i32_0 : i32, i32
  }
  func.func @transform_7(%arg0: i32) -> (i32, i32) {
    %c0_i32 = arith.constant 0 : i32
    %c0_i32_0 = arith.constant 0 : i32
    return %arg0, %c0_i32 : i32, i32
  }
}

</mosaic_0001>

<llo_original>
// kernel: mlp_forward.1
$region0: #{mlp_forward.1}
  #allocation0 [shape = 'u32[]', space=smem, size = 0x4, offset = 0x4, fixed_abs, tag = 'smem constant byte address 0x4 - core index']
  #allocation1 [shape = 'u32[144,128]{1,0:T(1,128)}', space=vmem, size = 0x12000, scoped, tag = 'internal scratch']
  %s0 = inlined_call_operand.vmem [shape: bf16[8,896], index: 0, kind: input, shape index: {}]
  %s1 = inlined_call_operand.hbm [shape: bf16[896,512], index: 1, kind: input, shape index: {}]
  %s2 = inlined_call_operand.vmem [shape: f32[1,512], index: 2, kind: input, shape index: {}]
  %s3 = inlined_call_operand.hbm [shape: bf16[512,512], index: 3, kind: input, shape index: {}]
  %s4 = inlined_call_operand.vmem [shape: f32[1,512], index: 4, kind: input, shape index: {}]
  %s5 = inlined_call_operand.vmem [shape: bf16[512,128], index: 5, kind: input, shape index: {}]
  %s6 = inlined_call_operand.vmem [shape: f32[1,128], index: 6, kind: input, shape index: {}]
  %s7 = inlined_call_operand.hbm [shape: f32[8,128], index: 7, kind: output, shape index: {}]
  %s8 = sld [smem:[#allocation0]]
  $region46: #{mlp_forward.1} parent=0
    _
  %s10 = ssub.s32 1, %s8
  %s11 = scalar_select 0, %s10, %s8
  $region1: #{mlp_forward.1} parent=0
    #allocation2 [shape = 'u8[917504]{0}', space=vmem, size = 0xe0000, scoped, tag = 'input window, operand 1, single buffered']
    #allocation3 [shape = 's32[1]{0}', space=sflag, size = 0x4, scoped, tag = 'scoped memory for mlp_forward.1']
    #allocation4 [shape = 's32[1]{0}', space=sflag, size = 0x4, scoped, tag = 'scoped memory for mlp_forward.1']
    #allocation5 [shape = 'u8[524288]{0}', space=vmem, size = 0x80000, scoped, tag = 'input window, operand 3, single buffered']
    #allocation6 [shape = 's32[1]{0}', space=sflag, size = 0x4, scoped, tag = 'scoped memory for mlp_forward.1']
    #allocation7 [shape = 'u8[4096]{0}', space=vmem, size = 0x1000, scoped, tag = 'output window, operand 0, single buffered']
    %12 = vsyncpa [#allocation3], 0
    %13 = vsyncpa [#allocation6], 0
    %14 = vsyncpa [#allocation4], 0
    // Predicated region
    $region2: #{mlp_forward.1} parent=1 // pred_check
      _
    $region3: #{mlp_forward.1} parent=1 // pred_check_branch
      %16 = sbr.rel (0) target = $region5
    $region4: #{mlp_forward.1} parent=1 // pred_region
      _
    $region5: #{mlp_forward.1} parent=1 // pred_fallthru
      _
    // Predicated region
    $region6: #{mlp_forward.1} parent=1 // pred_check
      _
    $region7: #{mlp_forward.1} parent=1 // pred_check_branch
      %18 = sbr.rel (0) target = $region9
    $region8: #{mlp_forward.1} parent=1 // pred_region
      %s20 = ssub.s32 28672, 28672
      %21 = vsyncadd [#allocation3], %s20
      %s22 = sshll.u32 [#allocation2], 4
      %s23 = int_to_ptr.vmem [resolvable:$true] %s22
      %28 = dma.hbm_to_vmem [thread:$0]  %s1, 28672, %s23, [#allocation3], 256, 256, 16
    $region9: #{mlp_forward.1} parent=1 // pred_fallthru
      _
    // Predicated region
    $region10: #{mlp_forward.1} parent=1 // pred_check
      _
    $region11: #{mlp_forward.1} parent=1 // pred_check_branch
      %30 = sbr.rel (0) target = $region13
    $region12: #{mlp_forward.1} parent=1 // pred_region
      _
    $region13: #{mlp_forward.1} parent=1 // pred_fallthru
      _
    // Predicated region
    $region14: #{mlp_forward.1} parent=1 // pred_check
      _
    $region15: #{mlp_forward.1} parent=1 // pred_check_branch
      %32 = sbr.rel (0) target = $region17
    $region16: #{mlp_forward.1} parent=1 // pred_region
      %s34 = ssub.s32 16384, 16384
      %35 = vsyncadd [#allocation6], %s34
      %s36 = sshll.u32 [#allocation5], 4
      %s37 = int_to_ptr.vmem [resolvable:$true] %s36
      %42 = dma.hbm_to_vmem [thread:$0]  %s3, 16384, %s37, [#allocation6], 256, 256, 16
    $region17: #{mlp_forward.1} parent=1 // pred_fallthru
      _
    // Predicated region
    $region18: #{mlp_forward.1} parent=1 // pred_check
      _
    $region19: #{mlp_forward.1} parent=1 // pred_check_branch
      %44 = sbr.rel (0) target = $region21
    $region20: #{mlp_forward.1} parent=1 // pred_region
      _
    $region21: #{mlp_forward.1} parent=1 // pred_fallthru
      _
    // Predicated region
    $region22: #{mlp_forward.1} parent=1 // pred_check
      _
    $region23: #{mlp_forward.1} parent=1 // pred_check_branch
      %46 = sbr.rel (0) target = $region25
    $region24: #{mlp_forward.1} parent=1 // pred_region
      _
    $region25: #{mlp_forward.1} parent=1 // pred_fallthru
      _
    // Predicated region
    $region26: #{mlp_forward.1} parent=1 // pred_check
      _
    $region27: #{mlp_forward.1} parent=1 // pred_check_branch
      %48 = sbr.rel (0) target = $region29
    $region28: #{mlp_forward.1} parent=1 // pred_region
      _
    $region29: #{mlp_forward.1} parent=1 // pred_fallthru
      _
    // Predicated region
    $region30: #{mlp_forward.1} parent=1 // pred_check
      _
    $region31: #{mlp_forward.1} parent=1 // pred_check_branch
      %50 = sbr.rel (0) target = $region33
    $region32: #{mlp_forward.1} parent=1 // pred_region
      %51 = dma.done [#allocation3], 28672
    $region33: #{mlp_forward.1} parent=1 // pred_fallthru
      _
    // Predicated region
    $region34: #{mlp_forward.1} parent=1 // pred_check
      _
    $region35: #{mlp_forward.1} parent=1 // pred_check_branch
      %53 = sbr.rel (0) target = $region37
    $region36: #{mlp_forward.1} parent=1 // pred_region
      %54 = dma.done [#allocation6], 16384
    $region37: #{mlp_forward.1} parent=1 // pred_fallthru
      _
    %v56 = vld [vmem:[%s0] sm:$0xff]
    %v57 = vld [vmem:[%s0 + $0x8] sm:$0xff]
    %v58 = vld [vmem:[%s0 + $0x10] sm:$0xff]
    %v59 = vld [vmem:[%s0 + $0x18] sm:$0xf]
    %v60 = vld [vmem:[#allocation2] sm:$0xff]
    %v61 = vld [vmem:[#allocation2 + $0x8] sm:$0xff]
    %v62 = vld [vmem:[#allocation2 + $0x10] sm:$0xff]
    %v63 = vld [vmem:[#allocation2 + $0x18] sm:$0xff]
    %v64 = vld [vmem:[#allocation2 + $0x20] sm:$0xff]
    %v65 = vld [vmem:[#allocation2 + $0x28] sm:$0xff]
    %v66 = vld [vmem:[#allocation2 + $0x30] sm:$0xff]
    %v67 = vld [vmem:[#allocation2 + $0x38] sm:$0xff]
    %v68 = vld [vmem:[#allocation2 + $0x40] sm:$0xff]
    %v69 = vld [vmem:[#allocation2 + $0x48] sm:$0xff]
    %v70 = vld [vmem:[#allocation2 + $0x50] sm:$0xff]
    %v71 = vld [vmem:[#allocation2 + $0x58] sm:$0xff]
    %v72 = vld [vmem:[#allocation2 + $0x60] sm:$0xff]
    %v73 = vld [vmem:[#allocation2 + $0x68] sm:$0xff]
    %v74 = vld [vmem:[#allocation2 + $0x70] sm:$0xff]
    %v75 = vld [vmem:[#allocation2 + $0x78] sm:$0xff]
    %v76 = vld [vmem:[#allocation2 + $0x80] sm:$0xff]
    %v77 = vld [vmem:[#allocation2 + $0x88] sm:$0xff]
    %v78 = vld [vmem:[#allocation2 + $0x90] sm:$0xff]
    %v79 = vld [vmem:[#allocation2 + $0x98] sm:$0xff]
    %v80 = vld [vmem:[#allocation2 + $0xa0] sm:$0xff]
    %v81 = vld [vmem:[#allocation2 + $0xa8] sm:$0xff]
    %v82 = vld [vmem:[#allocation2 + $0xb0] sm:$0xff]
    %v83 = vld [vmem:[#allocation2 + $0xb8] sm:$0xff]
    %v84 = vld [vmem:[#allocation2 + $0xc0] sm:$0xff]
    %v85 = vld [vmem:[#allocation2 + $0xc8] sm:$0xff]
    %v86 = vld [vmem:[#allocation2 + $0xd0] sm:$0xff]
    %v87 = vld [vmem:[#allocation2 + $0xd8] sm:$0xff]
    %v88 = vld [vmem:[#allocation2 + $0xe0] sm:$0xff]
    %v89 = vld [vmem:[#allocation2 + $0xe8] sm:$0xff]
    %v90 = vld [vmem:[#allocation2 + $0xf0] sm:$0xff]
    %v91 = vld [vmem:[#allocation2 + $0xf8] sm:$0xff]
    %v92 = vld [vmem:[#allocation2 + $0x100] sm:$0xff]
    %v93 = vld [vmem:[#allocation2 + $0x108] sm:$0xff]
    %v94 = vld [vmem:[#allocation2 + $0x110] sm:$0xff]
    %v95 = vld [vmem:[#allocation2 + $0x118] sm:$0xff]
    %v96 = vld [vmem:[#allocation2 + $0x120] sm:$0xff]
    %v97 = vld [vmem:[#allocation2 + $0x128] sm:$0xff]
    %v98 = vld [vmem:[#allocation2 + $0x130] sm:$0xff]
    %v99 = vld [vmem:[#allocation2 + $0x138] sm:$0xff]
    %v100 = vld [vmem:[#allocation2 + $0x140] sm:$0xff]
    %v101 = vld [vmem:[#allocation2 + $0x148] sm:$0xff]
    %v102 = vld [vmem:[#allocation2 + $0x150] sm:$0xff]
    %v103 = vld [vmem:[#allocation2 + $0x158] sm:$0xff]
    %v104 = vld [vmem:[#allocation2 + $0x160] sm:$0xff]
    %v105 = vld [vmem:[#allocation2 + $0x168] sm:$0xff]
    %v106 = vld [vmem:[#allocation2 + $0x170] sm:$0xff]
    %v107 = vld [vmem:[#allocation2 + $0x178] sm:$0xff]
    %v108 = vld [vmem:[#allocation2 + $0x180] sm:$0xff]
    %v109 = vld [vmem:[#allocation2 + $0x188] sm:$0xff]
    %v110 = vld [vmem:[#allocation2 + $0x190] sm:$0xff]
    %v111 = vld [vmem:[#allocation2 + $0x198] sm:$0xff]
    %v112 = vld [vmem:[#allocation2 + $0x1a0] sm:$0xff]
    %v113 = vld [vmem:[#allocation2 + $0x1a8] sm:$0xff]
    %v114 = vld [vmem:[#allocation2 + $0x1b0] sm:$0xff]
    %v115 = vld [vmem:[#allocation2 + $0x1b8] sm:$0xff]
    %v116 = vld [vmem:[#allocation2 + $0x1c0] sm:$0xff]
    %v117 = vld [vmem:[#allocation2 + $0x1c8] sm:$0xff]
    %v118 = vld [vmem:[#allocation2 + $0x1d0] sm:$0xff]
    %v119 = vld [vmem:[#allocation2 + $0x1d8] sm:$0xff]
    %v120 = vld [vmem:[#allocation2 + $0x1e0] sm:$0xff]
    %v121 = vld [vmem:[#allocation2 + $0x1e8] sm:$0xff]
    %v122 = vld [vmem:[#allocation2 + $0x1f0] sm:$0xff]
    %v123 = vld [vmem:[#allocation2 + $0x1f8] sm:$0xff]
    %v124 = vld [vmem:[#allocation2 + $0x200] sm:$0xff]
    %v125 = vld [vmem:[#allocation2 + $0x208] sm:$0xff]
    %v126 = vld [vmem:[#allocation2 + $0x210] sm:$0xff]
    %v127 = vld [vmem:[#allocation2 + $0x218] sm:$0xff]
    %v128 = vld [vmem:[#allocation2 + $0x220] sm:$0xff]
    %v129 = vld [vmem:[#allocation2 + $0x228] sm:$0xff]
    %v130 = vld [vmem:[#allocation2 + $0x230] sm:$0xff]
    %v131 = vld [vmem:[#allocation2 + $0x238] sm:$0xff]
    %v132 = vld [vmem:[#allocation2 + $0x240] sm:$0xff]
    %v133 = vld [vmem:[#allocation2 + $0x248] sm:$0xff]
    %v134 = vld [vmem:[#allocation2 + $0x250] sm:$0xff]
    %v135 = vld [vmem:[#allocation2 + $0x258] sm:$0xff]
    %v136 = vld [vmem:[#allocation2 + $0x260] sm:$0xff]
    %v137 = vld [vmem:[#allocation2 + $0x268] sm:$0xff]
    %v138 = vld [vmem:[#allocation2 + $0x270] sm:$0xff]
    %v139 = vld [vmem:[#allocation2 + $0x278] sm:$0xff]
    %v140 = vld [vmem:[#allocation2 + $0x280] sm:$0xff]
    %v141 = vld [vmem:[#allocation2 + $0x288] sm:$0xff]
    %v142 = vld [vmem:[#allocation2 + $0x290] sm:$0xff]
    %v143 = vld [vmem:[#allocation2 + $0x298] sm:$0xff]
    %v144 = vld [vmem:[#allocation2 + $0x2a0] sm:$0xff]
    %v145 = vld [vmem:[#allocation2 + $0x2a8] sm:$0xff]
    %v146 = vld [vmem:[#allocation2 + $0x2b0] sm:$0xff]
    %v147 = vld [vmem:[#allocation2 + $0x2b8] sm:$0xff]
    %v148 = vld [vmem:[#allocation2 + $0x2c0] sm:$0xff]
    %v149 = vld [vmem:[#allocation2 + $0x2c8] sm:$0xff]
    %v150 = vld [vmem:[#allocation2 + $0x2d0] sm:$0xff]
    %v151 = vld [vmem:[#allocation2 + $0x2d8] sm:$0xff]
    %v152 = vld [vmem:[#allocation2 + $0x2e0] sm:$0xff]
    %v153 = vld [vmem:[#allocation2 + $0x2e8] sm:$0xff]
    %v154 = vld [vmem:[#allocation2 + $0x2f0] sm:$0xff]
    %v155 = vld [vmem:[#allocation2 + $0x2f8] sm:$0xff]
    %v156 = vld [vmem:[#allocation2 + $0x300] sm:$0xff]
    %v157 = vld [vmem:[#allocation2 + $0x308] sm:$0xff]
    %v158 = vld [vmem:[#allocation2 + $0x310] sm:$0xff]
    %v159 = vld [vmem:[#allocation2 + $0x318] sm:$0xff]
    %v160 = vld [vmem:[#allocation2 + $0x320] sm:$0xff]
    %v161 = vld [vmem:[#allocation2 + $0x328] sm:$0xff]
    %v162 = vld [vmem:[#allocation2 + $0x330] sm:$0xff]
    %v163 = vld [vmem:[#allocation2 + $0x338] sm:$0xff]
    %v164 = vld [vmem:[#allocation2 + $0x340] sm:$0xff]
    %v165 = vld [vmem:[#allocation2 + $0x348] sm:$0xff]
    %v166 = vld [vmem:[#allocation2 + $0x350] sm:$0xff]
    %v167 = vld [vmem:[#allocation2 + $0x358] sm:$0xff]
    %v168 = vld [vmem:[#allocation2 + $0x360] sm:$0xff]
    %v169 = vld [vmem:[#allocation2 + $0x368] sm:$0xff]
    %v170 = vld [vmem:[#allocation2 + $0x370] sm:$0xff]
    %v171 = vld [vmem:[#allocation2 + $0x378] sm:$0xff]
    %v172 = vld [vmem:[#allocation2 + $0x380] sm:$0xff]
    %v173 = vld [vmem:[#allocation2 + $0x388] sm:$0xff]
    %v174 = vld [vmem:[#allocation2 + $0x390] sm:$0xff]
    %v175 = vld [vmem:[#allocation2 + $0x398] sm:$0xff]
    %v176 = vld [vmem:[#allocation2 + $0x3a0] sm:$0xff]
    %v177 = vld [vmem:[#allocation2 + $0x3a8] sm:$0xff]
    %v178 = vld [vmem:[#allocation2 + $0x3b0] sm:$0xff]
    %v179 = vld [vmem:[#allocation2 + $0x3b8] sm:$0xff]
    %v180 = vld [vmem:[#allocation2 + $0x3c0] sm:$0xff]
    %v181 = vld [vmem:[#allocation2 + $0x3c8] sm:$0xff]
    %v182 = vld [vmem:[#allocation2 + $0x3d0] sm:$0xff]
    %v183 = vld [vmem:[#allocation2 + $0x3d8] sm:$0xff]
    %v184 = vld [vmem:[#allocation2 + $0x3e0] sm:$0xff]
    %v185 = vld [vmem:[#allocation2 + $0x3e8] sm:$0xff]
    %v186 = vld [vmem:[#allocation2 + $0x3f0] sm:$0xff]
    %v187 = vld [vmem:[#allocation2 + $0x3f8] sm:$0xff]
    %v188 = vld [vmem:[#allocation2 + $0x400] sm:$0xff]
    %v189 = vld [vmem:[#allocation2 + $0x408] sm:$0xff]
    %v190 = vld [vmem:[#allocation2 + $0x410] sm:$0xff]
    %v191 = vld [vmem:[#allocation2 + $0x418] sm:$0xff]
    %v192 = vld [vmem:[#allocation2 + $0x420] sm:$0xff]
    %v193 = vld [vmem:[#allocation2 + $0x428] sm:$0xff]
    %v194 = vld [vmem:[#allocation2 + $0x430] sm:$0xff]
    %v195 = vld [vmem:[#allocation2 + $0x438] sm:$0xff]
    %v196 = vld [vmem:[#allocation2 + $0x440] sm:$0xff]
    %v197 = vld [vmem:[#allocation2 + $0x448] sm:$0xff]
    %v198 = vld [vmem:[#allocation2 + $0x450] sm:$0xff]
    %v199 = vld [vmem:[#allocation2 + $0x458] sm:$0xff]
    %v200 = vld [vmem:[#allocation2 + $0x460] sm:$0xff]
    %v201 = vld [vmem:[#allocation2 + $0x468] sm:$0xff]
    %v202 = vld [vmem:[#allocation2 + $0x470] sm:$0xff]
    %v203 = vld [vmem:[#allocation2 + $0x478] sm:$0xff]
    %v204 = vld [vmem:[#allocation2 + $0x480] sm:$0xff]
    %v205 = vld [vmem:[#allocation2 + $0x488] sm:$0xff]
    %v206 = vld [vmem:[#allocation2 + $0x490] sm:$0xff]
    %v207 = vld [vmem:[#allocation2 + $0x498] sm:$0xff]
    %v208 = vld [vmem:[#allocation2 + $0x4a0] sm:$0xff]
    %v209 = vld [vmem:[#allocation2 + $0x4a8] sm:$0xff]
    %v210 = vld [vmem:[#allocation2 + $0x4b0] sm:$0xff]
    %v211 = vld [vmem:[#allocation2 + $0x4b8] sm:$0xff]
    %v212 = vld [vmem:[#allocation2 + $0x4c0] sm:$0xff]
    %v213 = vld [vmem:[#allocation2 + $0x4c8] sm:$0xff]
    %v214 = vld [vmem:[#allocation2 + $0x4d0] sm:$0xff]
    %v215 = vld [vmem:[#allocation2 + $0x4d8] sm:$0xff]
    %v216 = vld [vmem:[#allocation2 + $0x4e0] sm:$0xff]
    %v217 = vld [vmem:[#allocation2 + $0x4e8] sm:$0xff]
    %v218 = vld [vmem:[#allocation2 + $0x4f0] sm:$0xff]
    %v219 = vld [vmem:[#allocation2 + $0x4f8] sm:$0xff]
    %v220 = vld [vmem:[#allocation2 + $0x500] sm:$0xff]
    %v221 = vld [vmem:[#allocation2 + $0x508] sm:$0xff]
    %v222 = vld [vmem:[#allocation2 + $0x510] sm:$0xff]
    %v223 = vld [vmem:[#allocation2 + $0x518] sm:$0xff]
    %v224 = vld [vmem:[#allocation2 + $0x520] sm:$0xff]
    %v225 = vld [vmem:[#allocation2 + $0x528] sm:$0xff]
    %v226 = vld [vmem:[#allocation2 + $0x530] sm:$0xff]
    %v227 = vld [vmem:[#allocation2 + $0x538] sm:$0xff]
    %v228 = vld [vmem:[#allocation2 + $0x540] sm:$0xff]
    %v229 = vld [vmem:[#allocation2 + $0x548] sm:$0xff]
    %v230 = vld [vmem:[#allocation2 + $0x550] sm:$0xff]
    %v231 = vld [vmem:[#allocation2 + $0x558] sm:$0xff]
    %v232 = vld [vmem:[#allocation2 + $0x560] sm:$0xff]
    %v233 = vld [vmem:[#allocation2 + $0x568] sm:$0xff]
    %v234 = vld [vmem:[#allocation2 + $0x570] sm:$0xff]
    %v235 = vld [vmem:[#allocation2 + $0x578] sm:$0xff]
    %v236 = vld [vmem:[#allocation2 + $0x580] sm:$0xff]
    %v237 = vld [vmem:[#allocation2 + $0x588] sm:$0xff]
    %v238 = vld [vmem:[#allocation2 + $0x590] sm:$0xff]
    %v239 = vld [vmem:[#allocation2 + $0x598] sm:$0xff]
    %v240 = vld [vmem:[#allocation2 + $0x5a0] sm:$0xff]
    %v241 = vld [vmem:[#allocation2 + $0x5a8] sm:$0xff]
    %v242 = vld [vmem:[#allocation2 + $0x5b0] sm:$0xff]
    %v243 = vld [vmem:[#allocation2 + $0x5b8] sm:$0xff]
    %v244 = vld [vmem:[#allocation2 + $0x5c0] sm:$0xff]
    %v245 = vld [vmem:[#allocation2 + $0x5c8] sm:$0xff]
    %v246 = vld [vmem:[#allocation2 + $0x5d0] sm:$0xff]
    %v247 = vld [vmem:[#allocation2 + $0x5d8] sm:$0xff]
    %v248 = vld [vmem:[#allocation2 + $0x5e0] sm:$0xff]
    %v249 = vld [vmem:[#allocation2 + $0x5e8] sm:$0xff]
    %v250 = vld [vmem:[#allocation2 + $0x5f0] sm:$0xff]
    %v251 = vld [vmem:[#allocation2 + $0x5f8] sm:$0xff]
    %v252 = vld [vmem:[#allocation2 + $0x600] sm:$0xff]
    %v253 = vld [vmem:[#allocation2 + $0x608] sm:$0xff]
    %v254 = vld [vmem:[#allocation2 + $0x610] sm:$0xff]
    %v255 = vld [vmem:[#allocation2 + $0x618] sm:$0xff]
    %v256 = vld [vmem:[#allocation2 + $0x620] sm:$0xff]
    %v257 = vld [vmem:[#allocation2 + $0x628] sm:$0xff]
    %v258 = vld [vmem:[#allocation2 + $0x630] sm:$0xff]
    %v259 = vld [vmem:[#allocation2 + $0x638] sm:$0xff]
    %v260 = vld [vmem:[#allocation2 + $0x640] sm:$0xff]
    %v261 = vld [vmem:[#allocation2 + $0x648] sm:$0xff]
    %v262 = vld [vmem:[#allocation2 + $0x650] sm:$0xff]
    %v263 = vld [vmem:[#allocation2 + $0x658] sm:$0xff]
    %v264 = vld [vmem:[#allocation2 + $0x660] sm:$0xff]
    %v265 = vld [vmem:[#allocation2 + $0x668] sm:$0xff]
    %v266 = vld [vmem:[#allocation2 + $0x670] sm:$0xff]
    %v267 = vld [vmem:[#allocation2 + $0x678] sm:$0xff]
    %v268 = vld [vmem:[#allocation2 + $0x680] sm:$0xff]
    %v269 = vld [vmem:[#allocation2 + $0x688] sm:$0xff]
    %v270 = vld [vmem:[#allocation2 + $0x690] sm:$0xff]
    %v271 = vld [vmem:[#allocation2 + $0x698] sm:$0xff]
    %v272 = vld [vmem:[#allocation2 + $0x6a0] sm:$0xff]
    %v273 = vld [vmem:[#allocation2 + $0x6a8] sm:$0xff]
    %v274 = vld [vmem:[#allocation2 + $0x6b0] sm:$0xff]
    %v275 = vld [vmem:[#allocation2 + $0x6b8] sm:$0xff]
    %v276 = vld [vmem:[#allocation2 + $0x6c0] sm:$0xff]
    %v277 = vld [vmem:[#allocation2 + $0x6c8] sm:$0xff]
    %v278 = vld [vmem:[#allocation2 + $0x6d0] sm:$0xff]
    %v279 = vld [vmem:[#allocation2 + $0x6d8] sm:$0xff]
    %v280 = vld [vmem:[#allocation2 + $0x6e0] sm:$0xff]
    %v281 = vld [vmem:[#allocation2 + $0x6e8] sm:$0xff]
    %v282 = vld [vmem:[#allocation2 + $0x6f0] sm:$0xff]
    %v283 = vld [vmem:[#allocation2 + $0x6f8] sm:$0xff]
    %v284 = vld [vmem:[%s2] sm:$0xf]
    %v286 = vlaneseq
    %v287 = vshrl.u32 %v286, 7
    %v288 = vsub.s32 0, %v287
    %v289 = vrot.slane %v284, %v288
    %v290 = vlaneseq
    %v291 = vshrl.u32 %v290, 7
    %v292 = vsub.s32 1, %v291
    %v293 = vrot.slane %v284, %v292
    %v294 = vlaneseq
    %v295 = vshrl.u32 %v294, 7
    %v296 = vsub.s32 2, %v295
    %v297 = vrot.slane %v284, %v296
    %v298 = vlaneseq
    %v299 = vshrl.u32 %v298, 7
    %v300 = vsub.s32 3, %v299
    %v301 = vrot.slane %v284, %v300
    %v310 = vunpack.c.l.b16 %v56
    %v311 = vunpack.c.h.b16 %v56
    %v312 = vunpack.c.l.b16 %v57
    %v313 = vunpack.c.h.b16 %v57
    %v314 = vunpack.c.l.b16 %v58
    %v315 = vunpack.c.h.b16 %v58
    %v316 = vunpack.c.l.b16 %v59
    %v317 = vpack.c.b16 %v310, %v310
    %v318 = vpack.c.b16 %v311, %v311
    %v319 = vpack.c.b16 %v312, %v312
    %v320 = vpack.c.b16 %v313, %v313
    %v321 = vpack.c.b16 %v314, %v314
    %v322 = vpack.c.b16 %v315, %v315
    %v323 = vpack.c.b16 %v316, %v316
    %v555 = vunpack.c.l.b16 %v60
    %v556 = vunpack.c.h.b16 %v60
    %v557 = vunpack.c.l.b16 %v61
    %v558 = vunpack.c.h.b16 %v61
    %v559 = vunpack.c.l.b16 %v62
    %v560 = vunpack.c.h.b16 %v62
    %v561 = vunpack.c.l.b16 %v63
    %v562 = vunpack.c.h.b16 %v63
    %v563 = vunpack.c.l.b16 %v64
    %v564 = vunpack.c.h.b16 %v64
    %v565 = vunpack.c.l.b16 %v65
    %v566 = vunpack.c.h.b16 %v65
    %v567 = vunpack.c.l.b16 %v66
    %v568 = vunpack.c.h.b16 %v66
    %v569 = vunpack.c.l.b16 %v67
    %v570 = vunpack.c.h.b16 %v67
    %v571 = vunpack.c.l.b16 %v68
    %v572 = vunpack.c.h.b16 %v68
    %v573 = vunpack.c.l.b16 %v69
    %v574 = vunpack.c.h.b16 %v69
    %v575 = vunpack.c.l.b16 %v70
    %v576 = vunpack.c.h.b16 %v70
    %v577 = vunpack.c.l.b16 %v71
    %v578 = vunpack.c.h.b16 %v71
    %v579 = vunpack.c.l.b16 %v72
    %v580 = vunpack.c.h.b16 %v72
    %v581 = vunpack.c.l.b16 %v73
    %v582 = vunpack.c.h.b16 %v73
    %v583 = vunpack.c.l.b16 %v74
    %v584 = vunpack.c.h.b16 %v74
    %v585 = vunpack.c.l.b16 %v75
    %v586 = vunpack.c.h.b16 %v75
    %v587 = vunpack.c.l.b16 %v76
    %v588 = vunpack.c.h.b16 %v76
    %v589 = vunpack.c.l.b16 %v77
    %v590 = vunpack.c.h.b16 %v77
    %v591 = vunpack.c.l.b16 %v78
    %v592 = vunpack.c.h.b16 %v78
    %v593 = vunpack.c.l.b16 %v79
    %v594 = vunpack.c.h.b16 %v79
    %v595 = vunpack.c.l.b16 %v80
    %v596 = vunpack.c.h.b16 %v80
    %v597 = vunpack.c.l.b16 %v81
    %v598 = vunpack.c.h.b16 %v81
    %v599 = vunpack.c.l.b16 %v82
    %v600 = vunpack.c.h.b16 %v82
    %v601 = vunpack.c.l.b16 %v83
    %v602 = vunpack.c.h.b16 %v83
    %v603 = vunpack.c.l.b16 %v84
    %v604 = vunpack.c.h.b16 %v84
    %v605 = vunpack.c.l.b16 %v85
    %v606 = vunpack.c.h.b16 %v85
    %v607 = vunpack.c.l.b16 %v86
    %v608 = vunpack.c.h.b16 %v86
    %v609 = vunpack.c.l.b16 %v87
    %v610 = vunpack.c.h.b16 %v87
    %v611 = vunpack.c.l.b16 %v88
    %v612 = vunpack.c.h.b16 %v88
    %v613 = vunpack.c.l.b16 %v89
    %v614 = vunpack.c.h.b16 %v89
    %v615 = vunpack.c.l.b16 %v90
    %v616 = vunpack.c.h.b16 %v90
    %v617 = vunpack.c.l.b16 %v91
    %v618 = vunpack.c.h.b16 %v91
    %v619 = vunpack.c.l.b16 %v92
    %v620 = vunpack.c.h.b16 %v92
    %v621 = vunpack.c.l.b16 %v93
    %v622 = vunpack.c.h.b16 %v93
    %v623 = vunpack.c.l.b16 %v94
    %v624 = vunpack.c.h.b16 %v94
    %v625 = vunpack.c.l.b16 %v95
    %v626 = vunpack.c.h.b16 %v95
    %v627 = vunpack.c.l.b16 %v96
    %v628 = vunpack.c.h.b16 %v96
    %v629 = vunpack.c.l.b16 %v97
    %v630 = vunpack.c.h.b16 %v97
    %v631 = vunpack.c.l.b16 %v98
    %v632 = vunpack.c.h.b16 %v98
    %v633 = vunpack.c.l.b16 %v99
    %v634 = vunpack.c.h.b16 %v99
    %v635 = vunpack.c.l.b16 %v100
    %v636 = vunpack.c.h.b16 %v100
    %v637 = vunpack.c.l.b16 %v101
    %v638 = vunpack.c.h.b16 %v101
    %v639 = vunpack.c.l.b16 %v102
    %v640 = vunpack.c.h.b16 %v102
    %v641 = vunpack.c.l.b16 %v103
    %v642 = vunpack.c.h.b16 %v103
    %v643 = vunpack.c.l.b16 %v104
    %v644 = vunpack.c.h.b16 %v104
    %v645 = vunpack.c.l.b16 %v105
    %v646 = vunpack.c.h.b16 %v105
    %v647 = vunpack.c.l.b16 %v106
    %v648 = vunpack.c.h.b16 %v106
    %v649 = vunpack.c.l.b16 %v107
    %v650 = vunpack.c.h.b16 %v107
    %v651 = vunpack.c.l.b16 %v108
    %v652 = vunpack.c.h.b16 %v108
    %v653 = vunpack.c.l.b16 %v109
    %v654 = vunpack.c.h.b16 %v109
    %v655 = vunpack.c.l.b16 %v110
    %v656 = vunpack.c.h.b16 %v110
    %v657 = vunpack.c.l.b16 %v111
    %v658 = vunpack.c.h.b16 %v111
    %v659 = vunpack.c.l.b16 %v112
    %v660 = vunpack.c.h.b16 %v112
    %v661 = vunpack.c.l.b16 %v113
    %v662 = vunpack.c.h.b16 %v113
    %v663 = vunpack.c.l.b16 %v114
    %v664 = vunpack.c.h.b16 %v114
    %v665 = vunpack.c.l.b16 %v115
    %v666 = vunpack.c.h.b16 %v115
    %v667 = vunpack.c.l.b16 %v116
    %v668 = vunpack.c.h.b16 %v116
    %v669 = vunpack.c.l.b16 %v117
    %v670 = vunpack.c.h.b16 %v117
    %v671 = vunpack.c.l.b16 %v118
    %v672 = vunpack.c.h.b16 %v118
    %v673 = vunpack.c.l.b16 %v119
    %v674 = vunpack.c.h.b16 %v119
    %v675 = vunpack.c.l.b16 %v120
    %v676 = vunpack.c.h.b16 %v120
    %v677 = vunpack.c.l.b16 %v121
    %v678 = vunpack.c.h.b16 %v121
    %v679 = vunpack.c.l.b16 %v122
    %v680 = vunpack.c.h.b16 %v122
    %v681 = vunpack.c.l.b16 %v123
    %v682 = vunpack.c.h.b16 %v123
    %v683 = vunpack.c.l.b16 %v124
    %v684 = vunpack.c.h.b16 %v124
    %v685 = vunpack.c.l.b16 %v125
    %v686 = vunpack.c.h.b16 %v125
    %v687 = vunpack.c.l.b16 %v126
    %v688 = vunpack.c.h.b16 %v126
    %v689 = vunpack.c.l.b16 %v127
    %v690 = vunpack.c.h.b16 %v127
    %v691 = vunpack.c.l.b16 %v128
    %v692 = vunpack.c.h.b16 %v128
    %v693 = vunpack.c.l.b16 %v129
    %v694 = vunpack.c.h.b16 %v129
    %v695 = vunpack.c.l.b16 %v130
    %v696 = vunpack.c.h.b16 %v130
    %v697 = vunpack.c.l.b16 %v131
    %v698 = vunpack.c.h.b16 %v131
    %v699 = vunpack.c.l.b16 %v132
    %v700 = vunpack.c.h.b16 %v132
    %v701 = vunpack.c.l.b16 %v133
    %v702 = vunpack.c.h.b16 %v133
    %v703 = vunpack.c.l.b16 %v134
    %v704 = vunpack.c.h.b16 %v134
    %v705 = vunpack.c.l.b16 %v135
    %v706 = vunpack.c.h.b16 %v135
    %v707 = vunpack.c.l.b16 %v136
    %v708 = vunpack.c.h.b16 %v136
    %v709 = vunpack.c.l.b16 %v137
    %v710 = vunpack.c.h.b16 %v137
    %v711 = vunpack.c.l.b16 %v138
    %v712 = vunpack.c.h.b16 %v138
    %v713 = vunpack.c.l.b16 %v139
    %v714 = vunpack.c.h.b16 %v139
    %v715 = vunpack.c.l.b16 %v140
    %v716 = vunpack.c.h.b16 %v140
    %v717 = vunpack.c.l.b16 %v141
    %v718 = vunpack.c.h.b16 %v141
    %v719 = vunpack.c.l.b16 %v142
    %v720 = vunpack.c.h.b16 %v142
    %v721 = vunpack.c.l.b16 %v143
    %v722 = vunpack.c.h.b16 %v143
    %v723 = vunpack.c.l.b16 %v144
    %v724 = vunpack.c.h.b16 %v144
    %v725 = vunpack.c.l.b16 %v145
    %v726 = vunpack.c.h.b16 %v145
    %v727 = vunpack.c.l.b16 %v146
    %v728 = vunpack.c.h.b16 %v146
    %v729 = vunpack.c.l.b16 %v147
    %v730 = vunpack.c.h.b16 %v147
    %v731 = vunpack.c.l.b16 %v148
    %v732 = vunpack.c.h.b16 %v148
    %v733 = vunpack.c.l.b16 %v149
    %v734 = vunpack.c.h.b16 %v149
    %v735 = vunpack.c.l.b16 %v150
    %v736 = vunpack.c.h.b16 %v150
    %v737 = vunpack.c.l.b16 %v151
    %v738 = vunpack.c.h.b16 %v151
    %v739 = vunpack.c.l.b16 %v152
    %v740 = vunpack.c.h.b16 %v152
    %v741 = vunpack.c.l.b16 %v153
    %v742 = vunpack.c.h.b16 %v153
    %v743 = vunpack.c.l.b16 %v154
    %v744 = vunpack.c.h.b16 %v154
    %v745 = vunpack.c.l.b16 %v155
    %v746 = vunpack.c.h.b16 %v155
    %v747 = vunpack.c.l.b16 %v156
    %v748 = vunpack.c.h.b16 %v156
    %v749 = vunpack.c.l.b16 %v157
    %v750 = vunpack.c.h.b16 %v157
    %v751 = vunpack.c.l.b16 %v158
    %v752 = vunpack.c.h.b16 %v158
    %v753 = vunpack.c.l.b16 %v159
    %v754 = vunpack.c.h.b16 %v159
    %v755 = vunpack.c.l.b16 %v160
    %v756 = vunpack.c.h.b16 %v160
    %v757 = vunpack.c.l.b16 %v161
    %v758 = vunpack.c.h.b16 %v161
    %v759 = vunpack.c.l.b16 %v162
    %v760 = vunpack.c.h.b16 %v162
    %v761 = vunpack.c.l.b16 %v163
    %v762 = vunpack.c.h.b16 %v163
    %v763 = vunpack.c.l.b16 %v164
    %v764 = vunpack.c.h.b16 %v164
    %v765 = vunpack.c.l.b16 %v165
    %v766 = vunpack.c.h.b16 %v165
    %v767 = vunpack.c.l.b16 %v166
    %v768 = vunpack.c.h.b16 %v166
    %v769 = vunpack.c.l.b16 %v167
    %v770 = vunpack.c.h.b16 %v167
    %v771 = vunpack.c.l.b16 %v168
    %v772 = vunpack.c.h.b16 %v168
    %v773 = vunpack.c.l.b16 %v169
    %v774 = vunpack.c.h.b16 %v169
    %v775 = vunpack.c.l.b16 %v170
    %v776 = vunpack.c.h.b16 %v170
    %v777 = vunpack.c.l.b16 %v171
    %v778 = vunpack.c.h.b16 %v171
    %v779 = vunpack.c.l.b16 %v172
    %v780 = vunpack.c.h.b16 %v172
    %v781 = vunpack.c.l.b16 %v173
    %v782 = vunpack.c.h.b16 %v173
    %v783 = vunpack.c.l.b16 %v174
    %v784 = vunpack.c.h.b16 %v174
    %v785 = vunpack.c.l.b16 %v175
    %v786 = vunpack.c.h.b16 %v175
    %v787 = vunpack.c.l.b16 %v176
    %v788 = vunpack.c.h.b16 %v176
    %v789 = vunpack.c.l.b16 %v177
    %v790 = vunpack.c.h.b16 %v177
    %v791 = vunpack.c.l.b16 %v178
    %v792 = vunpack.c.h.b16 %v178
    %v793 = vunpack.c.l.b16 %v179
    %v794 = vunpack.c.h.b16 %v179
    %v795 = vunpack.c.l.b16 %v180
    %v796 = vunpack.c.h.b16 %v180
    %v797 = vunpack.c.l.b16 %v181
    %v798 = vunpack.c.h.b16 %v181
    %v799 = vunpack.c.l.b16 %v182
    %v800 = vunpack.c.h.b16 %v182
    %v801 = vunpack.c.l.b16 %v183
    %v802 = vunpack.c.h.b16 %v183
    %v803 = vunpack.c.l.b16 %v184
    %v804 = vunpack.c.h.b16 %v184
    %v805 = vunpack.c.l.b16 %v185
    %v806 = vunpack.c.h.b16 %v185
    %v807 = vunpack.c.l.b16 %v186
    %v808 = vunpack.c.h.b16 %v186
    %v809 = vunpack.c.l.b16 %v187
    %v810 = vunpack.c.h.b16 %v187
    %v811 = vunpack.c.l.b16 %v188
    %v812 = vunpack.c.h.b16 %v188
    %v813 = vunpack.c.l.b16 %v189
    %v814 = vunpack.c.h.b16 %v189
    %v815 = vunpack.c.l.b16 %v190
    %v816 = vunpack.c.h.b16 %v190
    %v817 = vunpack.c.l.b16 %v191
    %v818 = vunpack.c.h.b16 %v191
    %v819 = vunpack.c.l.b16 %v192
    %v820 = vunpack.c.h.b16 %v192
    %v821 = vunpack.c.l.b16 %v193
    %v822 = vunpack.c.h.b16 %v193
    %v823 = vunpack.c.l.b16 %v194
    %v824 = vunpack.c.h.b16 %v194
    %v825 = vunpack.c.l.b16 %v195
    %v826 = vunpack.c.h.b16 %v195
    %v827 = vunpack.c.l.b16 %v196
    %v828 = vunpack.c.h.b16 %v196
    %v829 = vunpack.c.l.b16 %v197
    %v830 = vunpack.c.h.b16 %v197
    %v831 = vunpack.c.l.b16 %v198
    %v832 = vunpack.c.h.b16 %v198
    %v833 = vunpack.c.l.b16 %v199
    %v834 = vunpack.c.h.b16 %v199
    %v835 = vunpack.c.l.b16 %v200
    %v836 = vunpack.c.h.b16 %v200
    %v837 = vunpack.c.l.b16 %v201
    %v838 = vunpack.c.h.b16 %v201
    %v839 = vunpack.c.l.b16 %v202
    %v840 = vunpack.c.h.b16 %v202
    %v841 = vunpack.c.l.b16 %v203
    %v842 = vunpack.c.h.b16 %v203
    %v843 = vunpack.c.l.b16 %v204
    %v844 = vunpack.c.h.b16 %v204
    %v845 = vunpack.c.l.b16 %v205
    %v846 = vunpack.c.h.b16 %v205
    %v847 = vunpack.c.l.b16 %v206
    %v848 = vunpack.c.h.b16 %v206
    %v849 = vunpack.c.l.b16 %v207
    %v850 = vunpack.c.h.b16 %v207
    %v851 = vunpack.c.l.b16 %v208
    %v852 = vunpack.c.h.b16 %v208
    %v853 = vunpack.c.l.b16 %v209
    %v854 = vunpack.c.h.b16 %v209
    %v855 = vunpack.c.l.b16 %v210
    %v856 = vunpack.c.h.b16 %v210
    %v857 = vunpack.c.l.b16 %v211
    %v858 = vunpack.c.h.b16 %v211
    %v859 = vunpack.c.l.b16 %v212
    %v860 = vunpack.c.h.b16 %v212
    %v861 = vunpack.c.l.b16 %v213
    %v862 = vunpack.c.h.b16 %v213
    %v863 = vunpack.c.l.b16 %v214
    %v864 = vunpack.c.h.b16 %v214
    %v865 = vunpack.c.l.b16 %v215
    %v866 = vunpack.c.h.b16 %v215
    %v867 = vunpack.c.l.b16 %v216
    %v868 = vunpack.c.h.b16 %v216
    %v869 = vunpack.c.l.b16 %v217
    %v870 = vunpack.c.h.b16 %v217
    %v871 = vunpack.c.l.b16 %v218
    %v872 = vunpack.c.h.b16 %v218
    %v873 = vunpack.c.l.b16 %v219
    %v874 = vunpack.c.h.b16 %v219
    %v875 = vunpack.c.l.b16 %v220
    %v876 = vunpack.c.h.b16 %v220
    %v877 = vunpack.c.l.b16 %v221
    %v878 = vunpack.c.h.b16 %v221
    %v879 = vunpack.c.l.b16 %v222
    %v880 = vunpack.c.h.b16 %v222
    %v881 = vunpack.c.l.b16 %v223
    %v882 = vunpack.c.h.b16 %v223
    %v883 = vunpack.c.l.b16 %v224
    %v884 = vunpack.c.h.b16 %v224
    %v885 = vunpack.c.l.b16 %v225
    %v886 = vunpack.c.h.b16 %v225
    %v887 = vunpack.c.l.b16 %v226
    %v888 = vunpack.c.h.b16 %v226
    %v889 = vunpack.c.l.b16 %v227
    %v890 = vunpack.c.h.b16 %v227
    %v891 = vunpack.c.l.b16 %v228
    %v892 = vunpack.c.h.b16 %v228
    %v893 = vunpack.c.l.b16 %v229
    %v894 = vunpack.c.h.b16 %v229
    %v895 = vunpack.c.l.b16 %v230
    %v896 = vunpack.c.h.b16 %v230
    %v897 = vunpack.c.l.b16 %v231
    %v898 = vunpack.c.h.b16 %v231
    %v899 = vunpack.c.l.b16 %v232
    %v900 = vunpack.c.h.b16 %v232
    %v901 = vunpack.c.l.b16 %v233
    %v902 = vunpack.c.h.b16 %v233
    %v903 = vunpack.c.l.b16 %v234
    %v904 = vunpack.c.h.b16 %v234
    %v905 = vunpack.c.l.b16 %v235
    %v906 = vunpack.c.h.b16 %v235
    %v907 = vunpack.c.l.b16 %v236
    %v908 = vunpack.c.h.b16 %v236
    %v909 = vunpack.c.l.b16 %v237
    %v910 = vunpack.c.h.b16 %v237
    %v911 = vunpack.c.l.b16 %v238
    %v912 = vunpack.c.h.b16 %v238
    %v913 = vunpack.c.l.b16 %v239
    %v914 = vunpack.c.h.b16 %v239
    %v915 = vunpack.c.l.b16 %v240
    %v916 = vunpack.c.h.b16 %v240
    %v917 = vunpack.c.l.b16 %v241
    %v918 = vunpack.c.h.b16 %v241
    %v919 = vunpack.c.l.b16 %v242
    %v920 = vunpack.c.h.b16 %v242
    %v921 = vunpack.c.l.b16 %v243
    %v922 = vunpack.c.h.b16 %v243
    %v923 = vunpack.c.l.b16 %v244
    %v924 = vunpack.c.h.b16 %v244
    %v925 = vunpack.c.l.b16 %v245
    %v926 = vunpack.c.h.b16 %v245
    %v927 = vunpack.c.l.b16 %v246
    %v928 = vunpack.c.h.b16 %v246
    %v929 = vunpack.c.l.b16 %v247
    %v930 = vunpack.c.h.b16 %v247
    %v931 = vunpack.c.l.b16 %v248
    %v932 = vunpack.c.h.b16 %v248
    %v933 = vunpack.c.l.b16 %v249
    %v934 = vunpack.c.h.b16 %v249
    %v935 = vunpack.c.l.b16 %v250
    %v936 = vunpack.c.h.b16 %v250
    %v937 = vunpack.c.l.b16 %v251
    %v938 = vunpack.c.h.b16 %v251
    %v939 = vunpack.c.l.b16 %v252
    %v940 = vunpack.c.h.b16 %v252
    %v941 = vunpack.c.l.b16 %v253
    %v942 = vunpack.c.h.b16 %v253
    %v943 = vunpack.c.l.b16 %v254
    %v944 = vunpack.c.h.b16 %v254
    %v945 = vunpack.c.l.b16 %v255
    %v946 = vunpack.c.h.b16 %v255
    %v947 = vunpack.c.l.b16 %v256
    %v948 = vunpack.c.h.b16 %v256
    %v949 = vunpack.c.l.b16 %v257
    %v950 = vunpack.c.h.b16 %v257
    %v951 = vunpack.c.l.b16 %v258
    %v952 = vunpack.c.h.b16 %v258
    %v953 = vunpack.c.l.b16 %v259
    %v954 = vunpack.c.h.b16 %v259
    %v955 = vunpack.c.l.b16 %v260
    %v956 = vunpack.c.h.b16 %v260
    %v957 = vunpack.c.l.b16 %v261
    %v958 = vunpack.c.h.b16 %v261
    %v959 = vunpack.c.l.b16 %v262
    %v960 = vunpack.c.h.b16 %v262
    %v961 = vunpack.c.l.b16 %v263
    %v962 = vunpack.c.h.b16 %v263
    %v963 = vunpack.c.l.b16 %v264
    %v964 = vunpack.c.h.b16 %v264
    %v965 = vunpack.c.l.b16 %v265
    %v966 = vunpack.c.h.b16 %v265
    %v967 = vunpack.c.l.b16 %v266
    %v968 = vunpack.c.h.b16 %v266
    %v969 = vunpack.c.l.b16 %v267
    %v970 = vunpack.c.h.b16 %v267
    %v971 = vunpack.c.l.b16 %v268
    %v972 = vunpack.c.h.b16 %v268
    %v973 = vunpack.c.l.b16 %v269
    %v974 = vunpack.c.h.b16 %v269
    %v975 = vunpack.c.l.b16 %v270
    %v976 = vunpack.c.h.b16 %v270
    %v977 = vunpack.c.l.b16 %v271
    %v978 = vunpack.c.h.b16 %v271
    %v979 = vunpack.c.l.b16 %v272
    %v980 = vunpack.c.h.b16 %v272
    %v981 = vunpack.c.l.b16 %v273
    %v982 = vunpack.c.h.b16 %v273
    %v983 = vunpack.c.l.b16 %v274
    %v984 = vunpack.c.h.b16 %v274
    %v985 = vunpack.c.l.b16 %v275
    %v986 = vunpack.c.h.b16 %v275
    %v987 = vunpack.c.l.b16 %v276
    %v988 = vunpack.c.h.b16 %v276
    %v989 = vunpack.c.l.b16 %v277
    %v990 = vunpack.c.h.b16 %v277
    %v991 = vunpack.c.l.b16 %v278
    %v992 = vunpack.c.h.b16 %v278
    %v993 = vunpack.c.l.b16 %v279
    %v994 = vunpack.c.h.b16 %v279
    %v995 = vunpack.c.l.b16 %v280
    %v996 = vunpack.c.h.b16 %v280
    %v997 = vunpack.c.l.b16 %v281
    %v998 = vunpack.c.h.b16 %v281
    %v999 = vunpack.c.l.b16 %v282
    %v1000 = vunpack.c.h.b16 %v282
    %v1001 = vunpack.c.l.b16 %v283
    %v1002 = vunpack.c.h.b16 %v283
    %v1003 = vpack.c.b16 %v559, %v555
    %v1004 = vpack.c.b16 %v560, %v556
    %v1005 = vpack.c.b16 %v561, %v557
    %v1006 = vpack.c.b16 %v562, %v558
    %v1007 = vpack.c.b16 %v567, %v563
    %v1008 = vpack.c.b16 %v568, %v564
    %v1009 = vpack.c.b16 %v569, %v565
    %v1010 = vpack.c.b16 %v570, %v566
    %v1011 = vpack.c.b16 %v575, %v571
    %v1012 = vpack.c.b16 %v576, %v572
    %v1013 = vpack.c.b16 %v577, %v573
    %v1014 = vpack.c.b16 %v578, %v574
    %v1015 = vpack.c.b16 %v583, %v579
    %v1016 = vpack.c.b16 %v584, %v580
    %v1017 = vpack.c.b16 %v585, %v581
    %v1018 = vpack.c.b16 %v586, %v582
    %v1019 = vpack.c.b16 %v591, %v587
    %v1020 = vpack.c.b16 %v592, %v588
    %v1021 = vpack.c.b16 %v593, %v589
    %v1022 = vpack.c.b16 %v594, %v590
    %v1023 = vpack.c.b16 %v599, %v595
    %v1024 = vpack.c.b16 %v600, %v596
    %v1025 = vpack.c.b16 %v601, %v597
    %v1026 = vpack.c.b16 %v602, %v598
    %v1027 = vpack.c.b16 %v607, %v603
    %v1028 = vpack.c.b16 %v608, %v604
    %v1029 = vpack.c.b16 %v609, %v605
    %v1030 = vpack.c.b16 %v610, %v606
    %v1031 = vpack.c.b16 %v615, %v611
    %v1032 = vpack.c.b16 %v616, %v612
    %v1033 = vpack.c.b16 %v617, %v613
    %v1034 = vpack.c.b16 %v618, %v614
    %v1035 = vpack.c.b16 %v623, %v619
    %v1036 = vpack.c.b16 %v624, %v620
    %v1037 = vpack.c.b16 %v625, %v621
    %v1038 = vpack.c.b16 %v626, %v622
    %v1039 = vpack.c.b16 %v631, %v627
    %v1040 = vpack.c.b16 %v632, %v628
    %v1041 = vpack.c.b16 %v633, %v629
    %v1042 = vpack.c.b16 %v634, %v630
    %v1043 = vpack.c.b16 %v639, %v635
    %v1044 = vpack.c.b16 %v640, %v636
    %v1045 = vpack.c.b16 %v641, %v637
    %v1046 = vpack.c.b16 %v642, %v638
    %v1047 = vpack.c.b16 %v647, %v643
    %v1048 = vpack.c.b16 %v648, %v644
    %v1049 = vpack.c.b16 %v649, %v645
    %v1050 = vpack.c.b16 %v650, %v646
    %v1051 = vpack.c.b16 %v655, %v651
    %v1052 = vpack.c.b16 %v656, %v652
    %v1053 = vpack.c.b16 %v657, %v653
    %v1054 = vpack.c.b16 %v658, %v654
    %v1055 = vpack.c.b16 %v663, %v659
    %v1056 = vpack.c.b16 %v664, %v660
    %v1057 = vpack.c.b16 %v665, %v661
    %v1058 = vpack.c.b16 %v666, %v662
    %v1059 = vpack.c.b16 %v671, %v667
    %v1060 = vpack.c.b16 %v672, %v668
    %v1061 = vpack.c.b16 %v673, %v669
    %v1062 = vpack.c.b16 %v674, %v670
    %v1063 = vpack.c.b16 %v679, %v675
    %v1064 = vpack.c.b16 %v680, %v676
    %v1065 = vpack.c.b16 %v681, %v677
    %v1066 = vpack.c.b16 %v682, %v678
    %v1067 = vpack.c.b16 %v687, %v683
    %v1068 = vpack.c.b16 %v688, %v684
    %v1069 = vpack.c.b16 %v689, %v685
    %v1070 = vpack.c.b16 %v690, %v686
    %v1071 = vpack.c.b16 %v695, %v691
    %v1072 = vpack.c.b16 %v696, %v692
    %v1073 = vpack.c.b16 %v697, %v693
    %v1074 = vpack.c.b16 %v698, %v694
    %v1075 = vpack.c.b16 %v703, %v699
    %v1076 = vpack.c.b16 %v704, %v700
    %v1077 = vpack.c.b16 %v705, %v701
    %v1078 = vpack.c.b16 %v706, %v702
    %v1079 = vpack.c.b16 %v711, %v707
    %v1080 = vpack.c.b16 %v712, %v708
    %v1081 = vpack.c.b16 %v713, %v709
    %v1082 = vpack.c.b16 %v714, %v710
    %v1083 = vpack.c.b16 %v719, %v715
    %v1084 = vpack.c.b16 %v720, %v716
    %v1085 = vpack.c.b16 %v721, %v717
    %v1086 = vpack.c.b16 %v722, %v718
    %v1087 = vpack.c.b16 %v727, %v723
    %v1088 = vpack.c.b16 %v728, %v724
    %v1089 = vpack.c.b16 %v729, %v725
    %v1090 = vpack.c.b16 %v730, %v726
    %v1091 = vpack.c.b16 %v735, %v731
    %v1092 = vpack.c.b16 %v736, %v732
    %v1093 = vpack.c.b16 %v737, %v733
    %v1094 = vpack.c.b16 %v738, %v734
    %v1095 = vpack.c.b16 %v743, %v739
    %v1096 = vpack.c.b16 %v744, %v740
    %v1097 = vpack.c.b16 %v745, %v741
    %v1098 = vpack.c.b16 %v746, %v742
    %v1099 = vpack.c.b16 %v751, %v747
    %v1100 = vpack.c.b16 %v752, %v748
    %v1101 = vpack.c.b16 %v753, %v749
    %v1102 = vpack.c.b16 %v754, %v750
    %v1103 = vpack.c.b16 %v759, %v755
    %v1104 = vpack.c.b16 %v760, %v756
    %v1105 = vpack.c.b16 %v761, %v757
    %v1106 = vpack.c.b16 %v762, %v758
    %v1107 = vpack.c.b16 %v767, %v763
    %v1108 = vpack.c.b16 %v768, %v764
    %v1109 = vpack.c.b16 %v769, %v765
    %v1110 = vpack.c.b16 %v770, %v766
    %v1111 = vpack.c.b16 %v775, %v771
    %v1112 = vpack.c.b16 %v776, %v772
    %v1113 = vpack.c.b16 %v777, %v773
    %v1114 = vpack.c.b16 %v778, %v774
    %v1115 = vpack.c.b16 %v783, %v779
    %v1116 = vpack.c.b16 %v784, %v780
    %v1117 = vpack.c.b16 %v785, %v781
    %v1118 = vpack.c.b16 %v786, %v782
    %v1119 = vpack.c.b16 %v791, %v787
    %v1120 = vpack.c.b16 %v792, %v788
    %v1121 = vpack.c.b16 %v793, %v789
    %v1122 = vpack.c.b16 %v794, %v790
    %v1123 = vpack.c.b16 %v799, %v795
    %v1124 = vpack.c.b16 %v800, %v796
    %v1125 = vpack.c.b16 %v801, %v797
    %v1126 = vpack.c.b16 %v802, %v798
    %v1127 = vpack.c.b16 %v807, %v803
    %v1128 = vpack.c.b16 %v808, %v804
    %v1129 = vpack.c.b16 %v809, %v805
    %v1130 = vpack.c.b16 %v810, %v806
    %v1131 = vpack.c.b16 %v815, %v811
    %v1132 = vpack.c.b16 %v816, %v812
    %v1133 = vpack.c.b16 %v817, %v813
    %v1134 = vpack.c.b16 %v818, %v814
    %v1135 = vpack.c.b16 %v823, %v819
    %v1136 = vpack.c.b16 %v824, %v820
    %v1137 = vpack.c.b16 %v825, %v821
    %v1138 = vpack.c.b16 %v826, %v822
    %v1139 = vpack.c.b16 %v831, %v827
    %v1140 = vpack.c.b16 %v832, %v828
    %v1141 = vpack.c.b16 %v833, %v829
    %v1142 = vpack.c.b16 %v834, %v830
    %v1143 = vpack.c.b16 %v839, %v835
    %v1144 = vpack.c.b16 %v840, %v836
    %v1145 = vpack.c.b16 %v841, %v837
    %v1146 = vpack.c.b16 %v842, %v838
    %v1147 = vpack.c.b16 %v847, %v843
    %v1148 = vpack.c.b16 %v848, %v844
    %v1149 = vpack.c.b16 %v849, %v845
    %v1150 = vpack.c.b16 %v850, %v846
    %v1151 = vpack.c.b16 %v855, %v851
    %v1152 = vpack.c.b16 %v856, %v852
    %v1153 = vpack.c.b16 %v857, %v853
    %v1154 = vpack.c.b16 %v858, %v854
    %v1155 = vpack.c.b16 %v863, %v859
    %v1156 = vpack.c.b16 %v864, %v860
    %v1157 = vpack.c.b16 %v865, %v861
    %v1158 = vpack.c.b16 %v866, %v862
    %v1159 = vpack.c.b16 %v871, %v867
    %v1160 = vpack.c.b16 %v872, %v868
    %v1161 = vpack.c.b16 %v873, %v869
    %v1162 = vpack.c.b16 %v874, %v870
    %v1163 = vpack.c.b16 %v879, %v875
    %v1164 = vpack.c.b16 %v880, %v876
    %v1165 = vpack.c.b16 %v881, %v877
    %v1166 = vpack.c.b16 %v882, %v878
    %v1167 = vpack.c.b16 %v887, %v883
    %v1168 = vpack.c.b16 %v888, %v884
    %v1169 = vpack.c.b16 %v889, %v885
    %v1170 = vpack.c.b16 %v890, %v886
    %v1171 = vpack.c.b16 %v895, %v891
    %v1172 = vpack.c.b16 %v896, %v892
    %v1173 = vpack.c.b16 %v897, %v893
    %v1174 = vpack.c.b16 %v898, %v894
    %v1175 = vpack.c.b16 %v903, %v899
    %v1176 = vpack.c.b16 %v904, %v900
    %v1177 = vpack.c.b16 %v905, %v901
    %v1178 = vpack.c.b16 %v906, %v902
    %v1179 = vpack.c.b16 %v911, %v907
    %v1180 = vpack.c.b16 %v912, %v908
    %v1181 = vpack.c.b16 %v913, %v909
    %v1182 = vpack.c.b16 %v914, %v910
    %v1183 = vpack.c.b16 %v919, %v915
    %v1184 = vpack.c.b16 %v920, %v916
    %v1185 = vpack.c.b16 %v921, %v917
    %v1186 = vpack.c.b16 %v922, %v918
    %v1187 = vpack.c.b16 %v927, %v923
    %v1188 = vpack.c.b16 %v928, %v924
    %v1189 = vpack.c.b16 %v929, %v925
    %v1190 = vpack.c.b16 %v930, %v926
    %v1191 = vpack.c.b16 %v935, %v931
    %v1192 = vpack.c.b16 %v936, %v932
    %v1193 = vpack.c.b16 %v937, %v933
    %v1194 = vpack.c.b16 %v938, %v934
    %v1195 = vpack.c.b16 %v943, %v939
    %v1196 = vpack.c.b16 %v944, %v940
    %v1197 = vpack.c.b16 %v945, %v941
    %v1198 = vpack.c.b16 %v946, %v942
    %v1199 = vpack.c.b16 %v951, %v947
    %v1200 = vpack.c.b16 %v952, %v948
    %v1201 = vpack.c.b16 %v953, %v949
    %v1202 = vpack.c.b16 %v954, %v950
    %v1203 = vpack.c.b16 %v959, %v955
    %v1204 = vpack.c.b16 %v960, %v956
    %v1205 = vpack.c.b16 %v961, %v957
    %v1206 = vpack.c.b16 %v962, %v958
    %v1207 = vpack.c.b16 %v967, %v963
    %v1208 = vpack.c.b16 %v968, %v964
    %v1209 = vpack.c.b16 %v969, %v965
    %v1210 = vpack.c.b16 %v970, %v966
    %v1211 = vpack.c.b16 %v975, %v971
    %v1212 = vpack.c.b16 %v976, %v972
    %v1213 = vpack.c.b16 %v977, %v973
    %v1214 = vpack.c.b16 %v978, %v974
    %v1215 = vpack.c.b16 %v983, %v979
    %v1216 = vpack.c.b16 %v984, %v980
    %v1217 = vpack.c.b16 %v985, %v981
    %v1218 = vpack.c.b16 %v986, %v982
    %v1219 = vpack.c.b16 %v991, %v987
    %v1220 = vpack.c.b16 %v992, %v988
    %v1221 = vpack.c.b16 %v993, %v989
    %v1222 = vpack.c.b16 %v994, %v990
    %v1223 = vpack.c.b16 %v999, %v995
    %v1224 = vpack.c.b16 %v1000, %v996
    %v1225 = vpack.c.b16 %v1001, %v997
    %v1226 = vpack.c.b16 %v1002, %v998
    %1451 = vmatprep.subr.bf16.mxu0 %v1004
    %1452 = vmatpush1.bf16.msra.mxu0 %v1003
    %1453 = vmatprep.subr.bf16.mxu0 %v1008
    %1454 = vmatpush1.bf16.msra.mxu0 %v1007
    %1455 = vmatprep.subr.bf16.mxu0 %v1012
    %1456 = vmatpush1.bf16.msra.mxu0 %v1011
    %1457 = vmatprep.subr.bf16.mxu0 %v1016
    %1458 = vmatpush1.bf16.msra.mxu0 %v1015
    %1459 = vmatprep.subr.bf16.mxu0 %v1020
    %1460 = vmatpush1.bf16.msra.mxu0 %v1019
    %1461 = vmatprep.subr.bf16.mxu0 %v1024
    %1462 = vmatpush1.bf16.msra.mxu0 %v1023
    %1463 = vmatprep.subr.bf16.mxu0 %v1028
    %1464 = vmatpush1.bf16.msra.mxu0 %v1027
    %1465 = vmatprep.subr.bf16.mxu0 %v1032
    %1466 = vmatpush1.bf16.msra.mxu0 %v1031
    %1467 = vmatprep.subr.bf16.mxu0 %v1036
    %1468 = vmatpush1.bf16.msra.mxu0 %v1035
    %1469 = vmatprep.subr.bf16.mxu0 %v1040
    %1470 = vmatpush1.bf16.msra.mxu0 %v1039
    %1471 = vmatprep.subr.bf16.mxu0 %v1044
    %1472 = vmatpush1.bf16.msra.mxu0 %v1043
    %1473 = vmatprep.subr.bf16.mxu0 %v1048
    %1474 = vmatpush1.bf16.msra.mxu0 %v1047
    %1475 = vmatprep.subr.bf16.mxu0 %v1052
    %1476 = vmatpush1.bf16.msra.mxu0 %v1051
    %1477 = vmatprep.subr.bf16.mxu0 %v1056
    %1478 = vmatpush1.bf16.msra.mxu0 %v1055
    %1479 = vmatprep.subr.bf16.mxu0 %v1060
    %1480 = vmatpush1.bf16.msra.mxu0 %v1059
    %1481 = vmatprep.subr.bf16.mxu0 %v1064
    %1482 = vmatpush1.bf16.msra.mxu0 %v1063
    %1483 = vmatprep.mubr.bf16.mxu0 %v318
    %1484 = vmatmul.mubr.bf16.gmra.mrb[0].mxu0 %v317
    %v1485 = vpop.f32.mrb[0].mxu0
    %v1486 = vadd.f32 %v289, %v1485
    %v1487 = vpop.f32.mrb[0].mxu0
    %v1488 = vadd.f32 %v293, %v1487
    %v1489 = vpop.f32.mrb[0].mxu0
    %v1490 = vpop.f32.mrb[0].mxu0
    %1491 = vdwg.mxu0
    %1492 = vmatprep.subr.bf16.mxu0 %v1068
    %1493 = vmatpush1.bf16.msra.mxu0 %v1067
    %1494 = vmatprep.subr.bf16.mxu0 %v1072
    %1495 = vmatpush1.bf16.msra.mxu0 %v1071
    %1496 = vmatprep.subr.bf16.mxu0 %v1076
    %1497 = vmatpush1.bf16.msra.mxu0 %v1075
    %1498 = vmatprep.subr.bf16.mxu0 %v1080
    %1499 = vmatpush1.bf16.msra.mxu0 %v1079
    %1500 = vmatprep.subr.bf16.mxu0 %v1084
    %1501 = vmatpush1.bf16.msra.mxu0 %v1083
    %1502 = vmatprep.subr.bf16.mxu0 %v1088
    %1503 = vmatpush1.bf16.msra.mxu0 %v1087
    %1504 = vmatprep.subr.bf16.mxu0 %v1092
    %1505 = vmatpush1.bf16.msra.mxu0 %v1091
    %1506 = vmatprep.subr.bf16.mxu0 %v1096
    %1507 = vmatpush1.bf16.msra.mxu0 %v1095
    %1508 = vmatprep.subr.bf16.mxu0 %v1100
    %1509 = vmatpush1.bf16.msra.mxu0 %v1099
    %1510 = vmatprep.subr.bf16.mxu0 %v1104
    %1511 = vmatpush1.bf16.msra.mxu0 %v1103
    %1512 = vmatprep.subr.bf16.mxu0 %v1108
    %1513 = vmatpush1.bf16.msra.mxu0 %v1107
    %1514 = vmatprep.subr.bf16.mxu0 %v1112
    %1515 = vmatpush1.bf16.msra.mxu0 %v1111
    %1516 = vmatprep.subr.bf16.mxu0 %v1116
    %1517 = vmatpush1.bf16.msra.mxu0 %v1115
    %1518 = vmatprep.subr.bf16.mxu0 %v1120
    %1519 = vmatpush1.bf16.msra.mxu0 %v1119
    %1520 = vmatprep.subr.bf16.mxu0 %v1124
    %1521 = vmatpush1.bf16.msra.mxu0 %v1123
    %1522 = vmatprep.subr.bf16.mxu0 %v1128
    %1523 = vmatpush1.bf16.msra.mxu0 %v1127
    %1524 = vmatprep.mubr.bf16.mxu0 %v320
    %1525 = vmatmul.mubr.bf16.gmra.mrb[0].mxu0 %v319
    %v1526 = vpop.f32.mrb[0].mxu0
    %v1527 = vadd.f32 %v1486, %v1526
    %v1528 = vpop.f32.mrb[0].mxu0
    %v1529 = vadd.f32 %v1488, %v1528
    %v1530 = vpop.f32.mrb[0].mxu0
    %v1531 = vpop.f32.mrb[0].mxu0
    %1532 = vdwg.mxu0
    %1533 = vmatprep.subr.bf16.mxu0 %v1132
    %1534 = vmatpush1.bf16.msra.mxu0 %v1131
    %1535 = vmatprep.subr.bf16.mxu0 %v1136
    %1536 = vmatpush1.bf16.msra.mxu0 %v1135
    %1537 = vmatprep.subr.bf16.mxu0 %v1140
    %1538 = vmatpush1.bf16.msra.mxu0 %v1139
    %1539 = vmatprep.subr.bf16.mxu0 %v1144
    %1540 = vmatpush1.bf16.msra.mxu0 %v1143
    %1541 = vmatprep.subr.bf16.mxu0 %v1148
    %1542 = vmatpush1.bf16.msra.mxu0 %v1147
    %1543 = vmatprep.subr.bf16.mxu0 %v1152
    %1544 = vmatpush1.bf16.msra.mxu0 %v1151
    %1545 = vmatprep.subr.bf16.mxu0 %v1156
    %1546 = vmatpush1.bf16.msra.mxu0 %v1155
    %1547 = vmatprep.subr.bf16.mxu0 %v1160
    %1548 = vmatpush1.bf16.msra.mxu0 %v1159
    %1549 = vmatprep.subr.bf16.mxu0 %v1164
    %1550 = vmatpush1.bf16.msra.mxu0 %v1163
    %1551 = vmatprep.subr.bf16.mxu0 %v1168
    %1552 = vmatpush1.bf16.msra.mxu0 %v1167
    %1553 = vmatprep.subr.bf16.mxu0 %v1172
    %1554 = vmatpush1.bf16.msra.mxu0 %v1171
    %1555 = vmatprep.subr.bf16.mxu0 %v1176
    %1556 = vmatpush1.bf16.msra.mxu0 %v1175
    %1557 = vmatprep.subr.bf16.mxu0 %v1180
    %1558 = vmatpush1.bf16.msra.mxu0 %v1179
    %1559 = vmatprep.subr.bf16.mxu0 %v1184
    %1560 = vmatpush1.bf16.msra.mxu0 %v1183
    %1561 = vmatprep.subr.bf16.mxu0 %v1188
    %1562 = vmatpush1.bf16.msra.mxu0 %v1187
    %1563 = vmatprep.subr.bf16.mxu0 %v1192
    %1564 = vmatpush1.bf16.msra.mxu0 %v1191
    %1565 = vmatprep.mubr.bf16.mxu0 %v322
    %1566 = vmatmul.mubr.bf16.gmra.mrb[0].mxu0 %v321
    %v1567 = vpop.f32.mrb[0].mxu0
    %v1568 = vadd.f32 %v1527, %v1567
    %v1569 = vpop.f32.mrb[0].mxu0
    %v1570 = vadd.f32 %v1529, %v1569
    %v1571 = vpop.f32.mrb[0].mxu0
    %v1572 = vpop.f32.mrb[0].mxu0
    %1573 = vdwg.mxu0
    %1574 = vmatprep.subr.bf16.mxu0 %v1196
    %1575 = vmatpush1.bf16.msra.mxu0 %v1195
    %1576 = vmatprep.subr.bf16.mxu0 %v1200
    %1577 = vmatpush1.bf16.msra.mxu0 %v1199
    %1578 = vmatprep.subr.bf16.mxu0 %v1204
    %1579 = vmatpush1.bf16.msra.mxu0 %v1203
    %1580 = vmatprep.subr.bf16.mxu0 %v1208
    %1581 = vmatpush1.bf16.msra.mxu0 %v1207
    %1582 = vmatprep.subr.bf16.mxu0 %v1212
    %1583 = vmatpush1.bf16.msra.mxu0 %v1211
    %1584 = vmatprep.subr.bf16.mxu0 %v1216
    %1585 = vmatpush1.bf16.msra.mxu0 %v1215
    %1586 = vmatprep.subr.bf16.mxu0 %v1220
    %1587 = vmatpush1.bf16.msra.mxu0 %v1219
    %1588 = vmatprep.subr.bf16.mxu0 %v1224
    %1589 = vmatpush1.bf16.msra.mxu0 %v1223
    %1590 = vmatprep.subr.bf16.mxu0 0
    %1591 = vmatpush1.bf16.msra.mxu0 0
    %1592 = vmatprep.subr.bf16.mxu0 0
    %1593 = vmatpush1.bf16.msra.mxu0 0
    %1594 = vmatprep.subr.bf16.mxu0 0
    %1595 = vmatpush1.bf16.msra.mxu0 0
    %1596 = vmatprep.subr.bf16.mxu0 0
    %1597 = vmatpush1.bf16.msra.mxu0 0
    %1598 = vmatprep.subr.bf16.mxu0 0
    %1599 = vmatpush1.bf16.msra.mxu0 0
    %1600 = vmatprep.subr.bf16.mxu0 0
    %1601 = vmatpush1.bf16.msra.mxu0 0
    %1602 = vmatprep.subr.bf16.mxu0 0
    %1603 = vmatpush1.bf16.msra.mxu0 0
    %1604 = vmatprep.subr.bf16.mxu0 0
    %1605 = vmatpush1.bf16.msra.mxu0 0
    %1606 = vmatprep.mubr.bf16.mxu0 0
    %1607 = vmatmul.mubr.bf16.gmra.mrb[0].mxu0 %v323
    %v1608 = vpop.f32.mrb[0].mxu0
    %v1609 = vadd.f32 %v1568, %v1608
    %v1610 = vpop.f32.mrb[0].mxu0
    %v1611 = vadd.f32 %v1570, %v1610
    %v1612 = vpop.f32.mrb[0].mxu0
    %v1613 = vpop.f32.mrb[0].mxu0
    %1614 = vdwg.mxu0
    %1615 = vmatprep.subr.bf16.mxu0 %v1006
    %1616 = vmatpush1.bf16.msra.mxu0 %v1005
    %1617 = vmatprep.subr.bf16.mxu0 %v1010
    %1618 = vmatpush1.bf16.msra.mxu0 %v1009
    %1619 = vmatprep.subr.bf16.mxu0 %v1014
    %1620 = vmatpush1.bf16.msra.mxu0 %v1013
    %1621 = vmatprep.subr.bf16.mxu0 %v1018
    %1622 = vmatpush1.bf16.msra.mxu0 %v1017
    %1623 = vmatprep.subr.bf16.mxu0 %v1022
    %1624 = vmatpush1.bf16.msra.mxu0 %v1021
    %1625 = vmatprep.subr.bf16.mxu0 %v1026
    %1626 = vmatpush1.bf16.msra.mxu0 %v1025
    %1627 = vmatprep.subr.bf16.mxu0 %v1030
    %1628 = vmatpush1.bf16.msra.mxu0 %v1029
    %1629 = vmatprep.subr.bf16.mxu0 %v1034
    %1630 = vmatpush1.bf16.msra.mxu0 %v1033
    %1631 = vmatprep.subr.bf16.mxu0 %v1038
    %1632 = vmatpush1.bf16.msra.mxu0 %v1037
    %1633 = vmatprep.subr.bf16.mxu0 %v1042
    %1634 = vmatpush1.bf16.msra.mxu0 %v1041
    %1635 = vmatprep.subr.bf16.mxu0 %v1046
    %1636 = vmatpush1.bf16.msra.mxu0 %v1045
    %1637 = vmatprep.subr.bf16.mxu0 %v1050
    %1638 = vmatpush1.bf16.msra.mxu0 %v1049
    %1639 = vmatprep.subr.bf16.mxu0 %v1054
    %1640 = vmatpush1.bf16.msra.mxu0 %v1053
    %1641 = vmatprep.subr.bf16.mxu0 %v1058
    %1642 = vmatpush1.bf16.msra.mxu0 %v1057
    %1643 = vmatprep.subr.bf16.mxu0 %v1062
    %1644 = vmatpush1.bf16.msra.mxu0 %v1061
    %1645 = vmatprep.subr.bf16.mxu0 %v1066
    %1646 = vmatpush1.bf16.msra.mxu0 %v1065
    %1647 = vmatprep.mubr.bf16.mxu0 %v318
    %1648 = vmatmul.mubr.bf16.gmra.mrb[0].mxu0 %v317
    %v1649 = vpop.f32.mrb[0].mxu0
    %v1650 = vadd.f32 %v297, %v1649
    %v1651 = vpop.f32.mrb[0].mxu0
    %v1652 = vadd.f32 %v301, %v1651
    %v1653 = vpop.f32.mrb[0].mxu0
    %v1654 = vpop.f32.mrb[0].mxu0
    %1655 = vdwg.mxu0
    %1656 = vmatprep.subr.bf16.mxu0 %v1070
    %1657 = vmatpush1.bf16.msra.mxu0 %v1069
    %1658 = vmatprep.subr.bf16.mxu0 %v1074
    %1659 = vmatpush1.bf16.msra.mxu0 %v1073
    %1660 = vmatprep.subr.bf16.mxu0 %v1078
    %1661 = vmatpush1.bf16.msra.mxu0 %v1077
    %1662 = vmatprep.subr.bf16.mxu0 %v1082
    %1663 = vmatpush1.bf16.msra.mxu0 %v1081
    %1664 = vmatprep.subr.bf16.mxu0 %v1086
    %1665 = vmatpush1.bf16.msra.mxu0 %v1085
    %1666 = vmatprep.subr.bf16.mxu0 %v1090
    %1667 = vmatpush1.bf16.msra.mxu0 %v1089
    %1668 = vmatprep.subr.bf16.mxu0 %v1094
    %1669 = vmatpush1.bf16.msra.mxu0 %v1093
    %1670 = vmatprep.subr.bf16.mxu0 %v1098
    %1671 = vmatpush1.bf16.msra.mxu0 %v1097
    %1672 = vmatprep.subr.bf16.mxu0 %v1102
    %1673 = vmatpush1.bf16.msra.mxu0 %v1101
    %1674 = vmatprep.subr.bf16.mxu0 %v1106
    %1675 = vmatpush1.bf16.msra.mxu0 %v1105
    %1676 = vmatprep.subr.bf16.mxu0 %v1110
    %1677 = vmatpush1.bf16.msra.mxu0 %v1109
    %1678 = vmatprep.subr.bf16.mxu0 %v1114
    %1679 = vmatpush1.bf16.msra.mxu0 %v1113
    %1680 = vmatprep.subr.bf16.mxu0 %v1118
    %1681 = vmatpush1.bf16.msra.mxu0 %v1117
    %1682 = vmatprep.subr.bf16.mxu0 %v1122
    %1683 = vmatpush1.bf16.msra.mxu0 %v1121
    %1684 = vmatprep.subr.bf16.mxu0 %v1126
    %1685 = vmatpush1.bf16.msra.mxu0 %v1125
    %1686 = vmatprep.subr.bf16.mxu0 %v1130
    %1687 = vmatpush1.bf16.msra.mxu0 %v1129
    %1688 = vmatprep.mubr.bf16.mxu0 %v320
    %1689 = vmatmul.mubr.bf16.gmra.mrb[0].mxu0 %v319
    %v1690 = vpop.f32.mrb[0].mxu0
    %v1691 = vadd.f32 %v1650, %v1690
    %v1692 = vpop.f32.mrb[0].mxu0
    %v1693 = vadd.f32 %v1652, %v1692
    %v1694 = vpop.f32.mrb[0].mxu0
    %v1695 = vpop.f32.mrb[0].mxu0
    %1696 = vdwg.mxu0
    %1697 = vmatprep.subr.bf16.mxu0 %v1134
    %1698 = vmatpush1.bf16.msra.mxu0 %v1133
    %1699 = vmatprep.subr.bf16.mxu0 %v1138
    %1700 = vmatpush1.bf16.msra.mxu0 %v1137
    %1701 = vmatprep.subr.bf16.mxu0 %v1142
    %1702 = vmatpush1.bf16.msra.mxu0 %v1141
    %1703 = vmatprep.subr.bf16.mxu0 %v1146
    %1704 = vmatpush1.bf16.msra.mxu0 %v1145
    %1705 = vmatprep.subr.bf16.mxu0 %v1150
    %1706 = vmatpush1.bf16.msra.mxu0 %v1149
    %1707 = vmatprep.subr.bf16.mxu0 %v1154
    %1708 = vmatpush1.bf16.msra.mxu0 %v1153
    %1709 = vmatprep.subr.bf16.mxu0 %v1158
    %1710 = vmatpush1.bf16.msra.mxu0 %v1157
    %1711 = vmatprep.subr.bf16.mxu0 %v1162
    %1712 = vmatpush1.bf16.msra.mxu0 %v1161
    %1713 = vmatprep.subr.bf16.mxu0 %v1166
    %1714 = vmatpush1.bf16.msra.mxu0 %v1165
    %1715 = vmatprep.subr.bf16.mxu0 %v1170
    %1716 = vmatpush1.bf16.msra.mxu0 %v1169
    %1717 = vmatprep.subr.bf16.mxu0 %v1174
    %1718 = vmatpush1.bf16.msra.mxu0 %v1173
    %1719 = vmatprep.subr.bf16.mxu0 %v1178
    %1720 = vmatpush1.bf16.msra.mxu0 %v1177
    %1721 = vmatprep.subr.bf16.mxu0 %v1182
    %1722 = vmatpush1.bf16.msra.mxu0 %v1181
    %1723 = vmatprep.subr.bf16.mxu0 %v1186
    %1724 = vmatpush1.bf16.msra.mxu0 %v1185
    %1725 = vmatprep.subr.bf16.mxu0 %v1190
    %1726 = vmatpush1.bf16.msra.mxu0 %v1189
    %1727 = vmatprep.subr.bf16.mxu0 %v1194
    %1728 = vmatpush1.bf16.msra.mxu0 %v1193
    %1729 = vmatprep.mubr.bf16.mxu0 %v322
    %1730 = vmatmul.mubr.bf16.gmra.mrb[0].mxu0 %v321
    %v1731 = vpop.f32.mrb[0].mxu0
    %v1732 = vadd.f32 %v1691, %v1731
    %v1733 = vpop.f32.mrb[0].mxu0
    %v1734 = vadd.f32 %v1693, %v1733
    %v1735 = vpop.f32.mrb[0].mxu0
    %v1736 = vpop.f32.mrb[0].mxu0
    %1737 = vdwg.mxu0
    %1738 = vmatprep.subr.bf16.mxu0 %v1198
    %1739 = vmatpush1.bf16.msra.mxu0 %v1197
    %1740 = vmatprep.subr.bf16.mxu0 %v1202
    %1741 = vmatpush1.bf16.msra.mxu0 %v1201
    %1742 = vmatprep.subr.bf16.mxu0 %v1206
    %1743 = vmatpush1.bf16.msra.mxu0 %v1205
    %1744 = vmatprep.subr.bf16.mxu0 %v1210
    %1745 = vmatpush1.bf16.msra.mxu0 %v1209
    %1746 = vmatprep.subr.bf16.mxu0 %v1214
    %1747 = vmatpush1.bf16.msra.mxu0 %v1213
    %1748 = vmatprep.subr.bf16.mxu0 %v1218
    %1749 = vmatpush1.bf16.msra.mxu0 %v1217
    %1750 = vmatprep.subr.bf16.mxu0 %v1222
    %1751 = vmatpush1.bf16.msra.mxu0 %v1221
    %1752 = vmatprep.subr.bf16.mxu0 %v1226
    %1753 = vmatpush1.bf16.msra.mxu0 %v1225
    %1754 = vmatprep.subr.bf16.mxu0 0
    %1755 = vmatpush1.bf16.msra.mxu0 0
    %1756 = vmatprep.subr.bf16.mxu0 0
    %1757 = vmatpush1.bf16.msra.mxu0 0
    %1758 = vmatprep.subr.bf16.mxu0 0
    %1759 = vmatpush1.bf16.msra.mxu0 0
    %1760 = vmatprep.subr.bf16.mxu0 0
    %1761 = vmatpush1.bf16.msra.mxu0 0
    %1762 = vmatprep.subr.bf16.mxu0 0
    %1763 = vmatpush1.bf16.msra.mxu0 0
    %1764 = vmatprep.subr.bf16.mxu0 0
    %1765 = vmatpush1.bf16.msra.mxu0 0
    %1766 = vmatprep.subr.bf16.mxu0 0
    %1767 = vmatpush1.bf16.msra.mxu0 0
    %1768 = vmatprep.subr.bf16.mxu0 0
    %1769 = vmatpush1.bf16.msra.mxu0 0
    %1770 = vmatprep.mubr.bf16.mxu0 0
    %1771 = vmatmul.mubr.bf16.gmra.mrb[0].mxu0 %v323
    %v1772 = vpop.f32.mrb[0].mxu0
    %v1773 = vadd.f32 %v1732, %v1772
    %v1774 = vpop.f32.mrb[0].mxu0
    %v1775 = vadd.f32 %v1734, %v1774
    %v1776 = vpop.f32.mrb[0].mxu0
    %v1777 = vpop.f32.mrb[0].mxu0
    %1778 = vdwg.mxu0
    %v1779 = vmax.f32 %v1609, 0.0
    %v1780 = vmax.f32 %v1611, 0.0
    %v1781 = vmax.f32 %v1773, 0.0
    %v1782 = vmax.f32 %v1775, 0.0
    %v1783 = vpack.c.bf16 %v1779, %v1779
    %v1784 = vpack.c.bf16 %v1780, %v1780
    %v1785 = vpack.c.bf16 %v1781, %v1781
    %v1786 = vpack.c.bf16 %v1782, %v1782
    %v1787 = vld [vmem:[#allocation5] sm:$0xff]
    %v1788 = vld [vmem:[#allocation5 + $0x8] sm:$0xff]
    %v1789 = vld [vmem:[#allocation5 + $0x10] sm:$0xff]
    %v1790 = vld [vmem:[#allocation5 + $0x18] sm:$0xff]
    %v1791 = vld [vmem:[#allocation5 + $0x20] sm:$0xff]
    %v1792 = vld [vmem:[#allocation5 + $0x28] sm:$0xff]
    %v1793 = vld [vmem:[#allocation5 + $0x30] sm:$0xff]
    %v1794 = vld [vmem:[#allocation5 + $0x38] sm:$0xff]
    %v1795 = vld [vmem:[#allocation5 + $0x40] sm:$0xff]
    %v1796 = vld [vmem:[#allocation5 + $0x48] sm:$0xff]
    %v1797 = vld [vmem:[#allocation5 + $0x50] sm:$0xff]
    %v1798 = vld [vmem:[#allocation5 + $0x58] sm:$0xff]
    %v1799 = vld [vmem:[#allocation5 + $0x60] sm:$0xff]
    %v1800 = vld [vmem:[#allocation5 + $0x68] sm:$0xff]
    %v1801 = vld [vmem:[#allocation5 + $0x70] sm:$0xff]
    %v1802 = vld [vmem:[#allocation5 + $0x78] sm:$0xff]
    %v1803 = vld [vmem:[#allocation5 + $0x80] sm:$0xff]
    %v1804 = vld [vmem:[#allocation5 + $0x88] sm:$0xff]
    %v1805 = vld [vmem:[#allocation5 + $0x90] sm:$0xff]
    %v1806 = vld [vmem:[#allocation5 + $0x98] sm:$0xff]
    %v1807 = vld [vmem:[#allocation5 + $0xa0] sm:$0xff]
    %v1808 = vld [vmem:[#allocation5 + $0xa8] sm:$0xff]
    %v1809 = vld [vmem:[#allocation5 + $0xb0] sm:$0xff]
    %v1810 = vld [vmem:[#allocation5 + $0xb8] sm:$0xff]
    %v1811 = vld [vmem:[#allocation5 + $0xc0] sm:$0xff]
    %v1812 = vld [vmem:[#allocation5 + $0xc8] sm:$0xff]
    %v1813 = vld [vmem:[#allocation5 + $0xd0] sm:$0xff]
    %v1814 = vld [vmem:[#allocation5 + $0xd8] sm:$0xff]
    %v1815 = vld [vmem:[#allocation5 + $0xe0] sm:$0xff]
    %v1816 = vld [vmem:[#allocation5 + $0xe8] sm:$0xff]
    %v1817 = vld [vmem:[#allocation5 + $0xf0] sm:$0xff]
    %v1818 = vld [vmem:[#allocation5 + $0xf8] sm:$0xff]
    %v1819 = vld [vmem:[#allocation5 + $0x100] sm:$0xff]
    %v1820 = vld [vmem:[#allocation5 + $0x108] sm:$0xff]
    %v1821 = vld [vmem:[#allocation5 + $0x110] sm:$0xff]
    %v1822 = vld [vmem:[#allocation5 + $0x118] sm:$0xff]
    %v1823 = vld [vmem:[#allocation5 + $0x120] sm:$0xff]
    %v1824 = vld [vmem:[#allocation5 + $0x128] sm:$0xff]
    %v1825 = vld [vmem:[#allocation5 + $0x130] sm:$0xff]
    %v1826 = vld [vmem:[#allocation5 + $0x138] sm:$0xff]
    %v1827 = vld [vmem:[#allocation5 + $0x140] sm:$0xff]
    %v1828 = vld [vmem:[#allocation5 + $0x148] sm:$0xff]
    %v1829 = vld [vmem:[#allocation5 + $0x150] sm:$0xff]
    %v1830 = vld [vmem:[#allocation5 + $0x158] sm:$0xff]
    %v1831 = vld [vmem:[#allocation5 + $0x160] sm:$0xff]
    %v1832 = vld [vmem:[#allocation5 + $0x168] sm:$0xff]
    %v1833 = vld [vmem:[#allocation5 + $0x170] sm:$0xff]
    %v1834 = vld [vmem:[#allocation5 + $0x178] sm:$0xff]
    %v1835 = vld [vmem:[#allocation5 + $0x180] sm:$0xff]
    %v1836 = vld [vmem:[#allocation5 + $0x188] sm:$0xff]
    %v1837 = vld [vmem:[#allocation5 + $0x190] sm:$0xff]
    %v1838 = vld [vmem:[#allocation5 + $0x198] sm:$0xff]
    %v1839 = vld [vmem:[#allocation5 + $0x1a0] sm:$0xff]
    %v1840 = vld [vmem:[#allocation5 + $0x1a8] sm:$0xff]
    %v1841 = vld [vmem:[#allocation5 + $0x1b0] sm:$0xff]
    %v1842 = vld [vmem:[#allocation5 + $0x1b8] sm:$0xff]
    %v1843 = vld [vmem:[#allocation5 + $0x1c0] sm:$0xff]
    %v1844 = vld [vmem:[#allocation5 + $0x1c8] sm:$0xff]
    %v1845 = vld [vmem:[#allocation5 + $0x1d0] sm:$0xff]
    %v1846 = vld [vmem:[#allocation5 + $0x1d8] sm:$0xff]
    %v1847 = vld [vmem:[#allocation5 + $0x1e0] sm:$0xff]
    %v1848 = vld [vmem:[#allocation5 + $0x1e8] sm:$0xff]
    %v1849 = vld [vmem:[#allocation5 + $0x1f0] sm:$0xff]
    %v1850 = vld [vmem:[#allocation5 + $0x1f8] sm:$0xff]
    %v1851 = vld [vmem:[#allocation5 + $0x200] sm:$0xff]
    %v1852 = vld [vmem:[#allocation5 + $0x208] sm:$0xff]
    %v1853 = vld [vmem:[#allocation5 + $0x210] sm:$0xff]
    %v1854 = vld [vmem:[#allocation5 + $0x218] sm:$0xff]
    %v1855 = vld [vmem:[#allocation5 + $0x220] sm:$0xff]
    %v1856 = vld [vmem:[#allocation5 + $0x228] sm:$0xff]
    %v1857 = vld [vmem:[#allocation5 + $0x230] sm:$0xff]
    %v1858 = vld [vmem:[#allocation5 + $0x238] sm:$0xff]
    %v1859 = vld [vmem:[#allocation5 + $0x240] sm:$0xff]
    %v1860 = vld [vmem:[#allocation5 + $0x248] sm:$0xff]
    %v1861 = vld [vmem:[#allocation5 + $0x250] sm:$0xff]
    %v1862 = vld [vmem:[#allocation5 + $0x258] sm:$0xff]
    %v1863 = vld [vmem:[#allocation5 + $0x260] sm:$0xff]
    %v1864 = vld [vmem:[#allocation5 + $0x268] sm:$0xff]
    %v1865 = vld [vmem:[#allocation5 + $0x270] sm:$0xff]
    %v1866 = vld [vmem:[#allocation5 + $0x278] sm:$0xff]
    %v1867 = vld [vmem:[#allocation5 + $0x280] sm:$0xff]
    %v1868 = vld [vmem:[#allocation5 + $0x288] sm:$0xff]
    %v1869 = vld [vmem:[#allocation5 + $0x290] sm:$0xff]
    %v1870 = vld [vmem:[#allocation5 + $0x298] sm:$0xff]
    %v1871 = vld [vmem:[#allocation5 + $0x2a0] sm:$0xff]
    %v1872 = vld [vmem:[#allocation5 + $0x2a8] sm:$0xff]
    %v1873 = vld [vmem:[#allocation5 + $0x2b0] sm:$0xff]
    %v1874 = vld [vmem:[#allocation5 + $0x2b8] sm:$0xff]
    %v1875 = vld [vmem:[#allocation5 + $0x2c0] sm:$0xff]
    %v1876 = vld [vmem:[#allocation5 + $0x2c8] sm:$0xff]
    %v1877 = vld [vmem:[#allocation5 + $0x2d0] sm:$0xff]
    %v1878 = vld [vmem:[#allocation5 + $0x2d8] sm:$0xff]
    %v1879 = vld [vmem:[#allocation5 + $0x2e0] sm:$0xff]
    %v1880 = vld [vmem:[#allocation5 + $0x2e8] sm:$0xff]
    %v1881 = vld [vmem:[#allocation5 + $0x2f0] sm:$0xff]
    %v1882 = vld [vmem:[#allocation5 + $0x2f8] sm:$0xff]
    %v1883 = vld [vmem:[#allocation5 + $0x300] sm:$0xff]
    %v1884 = vld [vmem:[#allocation5 + $0x308] sm:$0xff]
    %v1885 = vld [vmem:[#allocation5 + $0x310] sm:$0xff]
    %v1886 = vld [vmem:[#allocation5 + $0x318] sm:$0xff]
    %v1887 = vld [vmem:[#allocation5 + $0x320] sm:$0xff]
    %v1888 = vld [vmem:[#allocation5 + $0x328] sm:$0xff]
    %v1889 = vld [vmem:[#allocation5 + $0x330] sm:$0xff]
    %v1890 = vld [vmem:[#allocation5 + $0x338] sm:$0xff]
    %v1891 = vld [vmem:[#allocation5 + $0x340] sm:$0xff]
    %v1892 = vld [vmem:[#allocation5 + $0x348] sm:$0xff]
    %v1893 = vld [vmem:[#allocation5 + $0x350] sm:$0xff]
    %v1894 = vld [vmem:[#allocation5 + $0x358] sm:$0xff]
    %v1895 = vld [vmem:[#allocation5 + $0x360] sm:$0xff]
    %v1896 = vld [vmem:[#allocation5 + $0x368] sm:$0xff]
    %v1897 = vld [vmem:[#allocation5 + $0x370] sm:$0xff]
    %v1898 = vld [vmem:[#allocation5 + $0x378] sm:$0xff]
    %v1899 = vld [vmem:[#allocation5 + $0x380] sm:$0xff]
    %v1900 = vld [vmem:[#allocation5 + $0x388] sm:$0xff]
    %v1901 = vld [vmem:[#allocation5 + $0x390] sm:$0xff]
    %v1902 = vld [vmem:[#allocation5 + $0x398] sm:$0xff]
    %v1903 = vld [vmem:[#allocation5 + $0x3a0] sm:$0xff]
    %v1904 = vld [vmem:[#allocation5 + $0x3a8] sm:$0xff]
    %v1905 = vld [vmem:[#allocation5 + $0x3b0] sm:$0xff]
    %v1906 = vld [vmem:[#allocation5 + $0x3b8] sm:$0xff]
    %v1907 = vld [vmem:[#allocation5 + $0x3c0] sm:$0xff]
    %v1908 = vld [vmem:[#allocation5 + $0x3c8] sm:$0xff]
    %v1909 = vld [vmem:[#allocation5 + $0x3d0] sm:$0xff]
    %v1910 = vld [vmem:[#allocation5 + $0x3d8] sm:$0xff]
    %v1911 = vld [vmem:[#allocation5 + $0x3e0] sm:$0xff]
    %v1912 = vld [vmem:[#allocation5 + $0x3e8] sm:$0xff]
    %v1913 = vld [vmem:[#allocation5 + $0x3f0] sm:$0xff]
    %v1914 = vld [vmem:[#allocation5 + $0x3f8] sm:$0xff]
    %v1915 = vld [vmem:[%s4] sm:$0xf]
    %v1917 = vlaneseq
    %v1918 = vshrl.u32 %v1917, 7
    %v1919 = vsub.s32 0, %v1918
    %v1920 = vrot.slane %v1915, %v1919
    %v1921 = vlaneseq
    %v1922 = vshrl.u32 %v1921, 7
    %v1923 = vsub.s32 1, %v1922
    %v1924 = vrot.slane %v1915, %v1923
    %v1925 = vlaneseq
    %v1926 = vshrl.u32 %v1925, 7
    %v1927 = vsub.s32 2, %v1926
    %v1928 = vrot.slane %v1915, %v1927
    %v1929 = vlaneseq
    %v1930 = vshrl.u32 %v1929, 7
    %v1931 = vsub.s32 3, %v1930
    %v1932 = vrot.slane %v1915, %v1931
    %v2065 = vunpack.c.l.b16 %v1787
    %v2066 = vunpack.c.h.b16 %v1787
    %v2067 = vunpack.c.l.b16 %v1788
    %v2068 = vunpack.c.h.b16 %v1788
    %v2069 = vunpack.c.l.b16 %v1789
    %v2070 = vunpack.c.h.b16 %v1789
    %v2071 = vunpack.c.l.b16 %v1790
    %v2072 = vunpack.c.h.b16 %v1790
    %v2073 = vunpack.c.l.b16 %v1791
    %v2074 = vunpack.c.h.b16 %v1791
    %v2075 = vunpack.c.l.b16 %v1792
    %v2076 = vunpack.c.h.b16 %v1792
    %v2077 = vunpack.c.l.b16 %v1793
    %v2078 = vunpack.c.h.b16 %v1793
    %v2079 = vunpack.c.l.b16 %v1794
    %v2080 = vunpack.c.h.b16 %v1794
    %v2081 = vunpack.c.l.b16 %v1795
    %v2082 = vunpack.c.h.b16 %v1795
    %v2083 = vunpack.c.l.b16 %v1796
    %v2084 = vunpack.c.h.b16 %v1796
    %v2085 = vunpack.c.l.b16 %v1797
    %v2086 = vunpack.c.h.b16 %v1797
    %v2087 = vunpack.c.l.b16 %v1798
    %v2088 = vunpack.c.h.b16 %v1798
    %v2089 = vunpack.c.l.b16 %v1799
    %v2090 = vunpack.c.h.b16 %v1799
    %v2091 = vunpack.c.l.b16 %v1800
    %v2092 = vunpack.c.h.b16 %v1800
    %v2093 = vunpack.c.l.b16 %v1801
    %v2094 = vunpack.c.h.b16 %v1801
    %v2095 = vunpack.c.l.b16 %v1802
    %v2096 = vunpack.c.h.b16 %v1802
    %v2097 = vunpack.c.l.b16 %v1803
    %v2098 = vunpack.c.h.b16 %v1803
    %v2099 = vunpack.c.l.b16 %v1804
    %v2100 = vunpack.c.h.b16 %v1804
    %v2101 = vunpack.c.l.b16 %v1805
    %v2102 = vunpack.c.h.b16 %v1805
    %v2103 = vunpack.c.l.b16 %v1806
    %v2104 = vunpack.c.h.b16 %v1806
    %v2105 = vunpack.c.l.b16 %v1807
    %v2106 = vunpack.c.h.b16 %v1807
    %v2107 = vunpack.c.l.b16 %v1808
    %v2108 = vunpack.c.h.b16 %v1808
    %v2109 = vunpack.c.l.b16 %v1809
    %v2110 = vunpack.c.h.b16 %v1809
    %v2111 = vunpack.c.l.b16 %v1810
    %v2112 = vunpack.c.h.b16 %v1810
    %v2113 = vunpack.c.l.b16 %v1811
    %v2114 = vunpack.c.h.b16 %v1811
    %v2115 = vunpack.c.l.b16 %v1812
    %v2116 = vunpack.c.h.b16 %v1812
    %v2117 = vunpack.c.l.b16 %v1813
    %v2118 = vunpack.c.h.b16 %v1813
    %v2119 = vunpack.c.l.b16 %v1814
    %v2120 = vunpack.c.h.b16 %v1814
    %v2121 = vunpack.c.l.b16 %v1815
    %v2122 = vunpack.c.h.b16 %v1815
    %v2123 = vunpack.c.l.b16 %v1816
    %v2124 = vunpack.c.h.b16 %v1816
    %v2125 = vunpack.c.l.b16 %v1817
    %v2126 = vunpack.c.h.b16 %v1817
    %v2127 = vunpack.c.l.b16 %v1818
    %v2128 = vunpack.c.h.b16 %v1818
    %v2129 = vunpack.c.l.b16 %v1819
    %v2130 = vunpack.c.h.b16 %v1819
    %v2131 = vunpack.c.l.b16 %v1820
    %v2132 = vunpack.c.h.b16 %v1820
    %v2133 = vunpack.c.l.b16 %v1821
    %v2134 = vunpack.c.h.b16 %v1821
    %v2135 = vunpack.c.l.b16 %v1822
    %v2136 = vunpack.c.h.b16 %v1822
    %v2137 = vunpack.c.l.b16 %v1823
    %v2138 = vunpack.c.h.b16 %v1823
    %v2139 = vunpack.c.l.b16 %v1824
    %v2140 = vunpack.c.h.b16 %v1824
    %v2141 = vunpack.c.l.b16 %v1825
    %v2142 = vunpack.c.h.b16 %v1825
    %v2143 = vunpack.c.l.b16 %v1826
    %v2144 = vunpack.c.h.b16 %v1826
    %v2145 = vunpack.c.l.b16 %v1827
    %v2146 = vunpack.c.h.b16 %v1827
    %v2147 = vunpack.c.l.b16 %v1828
    %v2148 = vunpack.c.h.b16 %v1828
    %v2149 = vunpack.c.l.b16 %v1829
    %v2150 = vunpack.c.h.b16 %v1829
    %v2151 = vunpack.c.l.b16 %v1830
    %v2152 = vunpack.c.h.b16 %v1830
    %v2153 = vunpack.c.l.b16 %v1831
    %v2154 = vunpack.c.h.b16 %v1831
    %v2155 = vunpack.c.l.b16 %v1832
    %v2156 = vunpack.c.h.b16 %v1832
    %v2157 = vunpack.c.l.b16 %v1833
    %v2158 = vunpack.c.h.b16 %v1833
    %v2159 = vunpack.c.l.b16 %v1834
    %v2160 = vunpack.c.h.b16 %v1834
    %v2161 = vunpack.c.l.b16 %v1835
    %v2162 = vunpack.c.h.b16 %v1835
    %v2163 = vunpack.c.l.b16 %v1836
    %v2164 = vunpack.c.h.b16 %v1836
    %v2165 = vunpack.c.l.b16 %v1837
    %v2166 = vunpack.c.h.b16 %v1837
    %v2167 = vunpack.c.l.b16 %v1838
    %v2168 = vunpack.c.h.b16 %v1838
    %v2169 = vunpack.c.l.b16 %v1839
    %v2170 = vunpack.c.h.b16 %v1839
    %v2171 = vunpack.c.l.b16 %v1840
    %v2172 = vunpack.c.h.b16 %v1840
    %v2173 = vunpack.c.l.b16 %v1841
    %v2174 = vunpack.c.h.b16 %v1841
    %v2175 = vunpack.c.l.b16 %v1842
    %v2176 = vunpack.c.h.b16 %v1842
    %v2177 = vunpack.c.l.b16 %v1843
    %v2178 = vunpack.c.h.b16 %v1843
    %v2179 = vunpack.c.l.b16 %v1844
    %v2180 = vunpack.c.h.b16 %v1844
    %v2181 = vunpack.c.l.b16 %v1845
    %v2182 = vunpack.c.h.b16 %v1845
    %v2183 = vunpack.c.l.b16 %v1846
    %v2184 = vunpack.c.h.b16 %v1846
    %v2185 = vunpack.c.l.b16 %v1847
    %v2186 = vunpack.c.h.b16 %v1847
    %v2187 = vunpack.c.l.b16 %v1848
    %v2188 = vunpack.c.h.b16 %v1848
    %v2189 = vunpack.c.l.b16 %v1849
    %v2190 = vunpack.c.h.b16 %v1849
    %v2191 = vunpack.c.l.b16 %v1850
    %v2192 = vunpack.c.h.b16 %v1850
    %v2193 = vunpack.c.l.b16 %v1851
    %v2194 = vunpack.c.h.b16 %v1851
    %v2195 = vunpack.c.l.b16 %v1852
    %v2196 = vunpack.c.h.b16 %v1852
    %v2197 = vunpack.c.l.b16 %v1853
    %v2198 = vunpack.c.h.b16 %v1853
    %v2199 = vunpack.c.l.b16 %v1854
    %v2200 = vunpack.c.h.b16 %v1854
    %v2201 = vunpack.c.l.b16 %v1855
    %v2202 = vunpack.c.h.b16 %v1855
    %v2203 = vunpack.c.l.b16 %v1856
    %v2204 = vunpack.c.h.b16 %v1856
    %v2205 = vunpack.c.l.b16 %v1857
    %v2206 = vunpack.c.h.b16 %v1857
    %v2207 = vunpack.c.l.b16 %v1858
    %v2208 = vunpack.c.h.b16 %v1858
    %v2209 = vunpack.c.l.b16 %v1859
    %v2210 = vunpack.c.h.b16 %v1859
    %v2211 = vunpack.c.l.b16 %v1860
    %v2212 = vunpack.c.h.b16 %v1860
    %v2213 = vunpack.c.l.b16 %v1861
    %v2214 = vunpack.c.h.b16 %v1861
    %v2215 = vunpack.c.l.b16 %v1862
    %v2216 = vunpack.c.h.b16 %v1862
    %v2217 = vunpack.c.l.b16 %v1863
    %v2218 = vunpack.c.h.b16 %v1863
    %v2219 = vunpack.c.l.b16 %v1864
    %v2220 = vunpack.c.h.b16 %v1864
    %v2221 = vunpack.c.l.b16 %v1865
    %v2222 = vunpack.c.h.b16 %v1865
    %v2223 = vunpack.c.l.b16 %v1866
    %v2224 = vunpack.c.h.b16 %v1866
    %v2225 = vunpack.c.l.b16 %v1867
    %v2226 = vunpack.c.h.b16 %v1867
    %v2227 = vunpack.c.l.b16 %v1868
    %v2228 = vunpack.c.h.b16 %v1868
    %v2229 = vunpack.c.l.b16 %v1869
    %v2230 = vunpack.c.h.b16 %v1869
    %v2231 = vunpack.c.l.b16 %v1870
    %v2232 = vunpack.c.h.b16 %v1870
    %v2233 = vunpack.c.l.b16 %v1871
    %v2234 = vunpack.c.h.b16 %v1871
    %v2235 = vunpack.c.l.b16 %v1872
    %v2236 = vunpack.c.h.b16 %v1872
    %v2237 = vunpack.c.l.b16 %v1873
    %v2238 = vunpack.c.h.b16 %v1873
    %v2239 = vunpack.c.l.b16 %v1874
    %v2240 = vunpack.c.h.b16 %v1874
    %v2241 = vunpack.c.l.b16 %v1875
    %v2242 = vunpack.c.h.b16 %v1875
    %v2243 = vunpack.c.l.b16 %v1876
    %v2244 = vunpack.c.h.b16 %v1876
    %v2245 = vunpack.c.l.b16 %v1877
    %v2246 = vunpack.c.h.b16 %v1877
    %v2247 = vunpack.c.l.b16 %v1878
    %v2248 = vunpack.c.h.b16 %v1878
    %v2249 = vunpack.c.l.b16 %v1879
    %v2250 = vunpack.c.h.b16 %v1879
    %v2251 = vunpack.c.l.b16 %v1880
    %v2252 = vunpack.c.h.b16 %v1880
    %v2253 = vunpack.c.l.b16 %v1881
    %v2254 = vunpack.c.h.b16 %v1881
    %v2255 = vunpack.c.l.b16 %v1882
    %v2256 = vunpack.c.h.b16 %v1882
    %v2257 = vunpack.c.l.b16 %v1883
    %v2258 = vunpack.c.h.b16 %v1883
    %v2259 = vunpack.c.l.b16 %v1884
    %v2260 = vunpack.c.h.b16 %v1884
    %v2261 = vunpack.c.l.b16 %v1885
    %v2262 = vunpack.c.h.b16 %v1885
    %v2263 = vunpack.c.l.b16 %v1886
    %v2264 = vunpack.c.h.b16 %v1886
    %v2265 = vunpack.c.l.b16 %v1887
    %v2266 = vunpack.c.h.b16 %v1887
    %v2267 = vunpack.c.l.b16 %v1888
    %v2268 = vunpack.c.h.b16 %v1888
    %v2269 = vunpack.c.l.b16 %v1889
    %v2270 = vunpack.c.h.b16 %v1889
    %v2271 = vunpack.c.l.b16 %v1890
    %v2272 = vunpack.c.h.b16 %v1890
    %v2273 = vunpack.c.l.b16 %v1891
    %v2274 = vunpack.c.h.b16 %v1891
    %v2275 = vunpack.c.l.b16 %v1892
    %v2276 = vunpack.c.h.b16 %v1892
    %v2277 = vunpack.c.l.b16 %v1893
    %v2278 = vunpack.c.h.b16 %v1893
    %v2279 = vunpack.c.l.b16 %v1894
    %v2280 = vunpack.c.h.b16 %v1894
    %v2281 = vunpack.c.l.b16 %v1895
    %v2282 = vunpack.c.h.b16 %v1895
    %v2283 = vunpack.c.l.b16 %v1896
    %v2284 = vunpack.c.h.b16 %v1896
    %v2285 = vunpack.c.l.b16 %v1897
    %v2286 = vunpack.c.h.b16 %v1897
    %v2287 = vunpack.c.l.b16 %v1898
    %v2288 = vunpack.c.h.b16 %v1898
    %v2289 = vunpack.c.l.b16 %v1899
    %v2290 = vunpack.c.h.b16 %v1899
    %v2291 = vunpack.c.l.b16 %v1900
    %v2292 = vunpack.c.h.b16 %v1900
    %v2293 = vunpack.c.l.b16 %v1901
    %v2294 = vunpack.c.h.b16 %v1901
    %v2295 = vunpack.c.l.b16 %v1902
    %v2296 = vunpack.c.h.b16 %v1902
    %v2297 = vunpack.c.l.b16 %v1903
    %v2298 = vunpack.c.h.b16 %v1903
    %v2299 = vunpack.c.l.b16 %v1904
    %v2300 = vunpack.c.h.b16 %v1904
    %v2301 = vunpack.c.l.b16 %v1905
    %v2302 = vunpack.c.h.b16 %v1905
    %v2303 = vunpack.c.l.b16 %v1906
    %v2304 = vunpack.c.h.b16 %v1906
    %v2305 = vunpack.c.l.b16 %v1907
    %v2306 = vunpack.c.h.b16 %v1907
    %v2307 = vunpack.c.l.b16 %v1908
    %v2308 = vunpack.c.h.b16 %v1908
    %v2309 = vunpack.c.l.b16 %v1909
    %v2310 = vunpack.c.h.b16 %v1909
    %v2311 = vunpack.c.l.b16 %v1910
    %v2312 = vunpack.c.h.b16 %v1910
    %v2313 = vunpack.c.l.b16 %v1911
    %v2314 = vunpack.c.h.b16 %v1911
    %v2315 = vunpack.c.l.b16 %v1912
    %v2316 = vunpack.c.h.b16 %v1912
    %v2317 = vunpack.c.l.b16 %v1913
    %v2318 = vunpack.c.h.b16 %v1913
    %v2319 = vunpack.c.l.b16 %v1914
    %v2320 = vunpack.c.h.b16 %v1914
    %v2321 = vpack.c.b16 %v2069, %v2065
    %v2322 = vpack.c.b16 %v2070, %v2066
    %v2323 = vpack.c.b16 %v2071, %v2067
    %v2324 = vpack.c.b16 %v2072, %v2068
    %v2325 = vpack.c.b16 %v2077, %v2073
    %v2326 = vpack.c.b16 %v2078, %v2074
    %v2327 = vpack.c.b16 %v2079, %v2075
    %v2328 = vpack.c.b16 %v2080, %v2076
    %v2329 = vpack.c.b16 %v2085, %v2081
    %v2330 = vpack.c.b16 %v2086, %v2082
    %v2331 = vpack.c.b16 %v2087, %v2083
    %v2332 = vpack.c.b16 %v2088, %v2084
    %v2333 = vpack.c.b16 %v2093, %v2089
    %v2334 = vpack.c.b16 %v2094, %v2090
    %v2335 = vpack.c.b16 %v2095, %v2091
    %v2336 = vpack.c.b16 %v2096, %v2092
    %v2337 = vpack.c.b16 %v2101, %v2097
    %v2338 = vpack.c.b16 %v2102, %v2098
    %v2339 = vpack.c.b16 %v2103, %v2099
    %v2340 = vpack.c.b16 %v2104, %v2100
    %v2341 = vpack.c.b16 %v2109, %v2105
    %v2342 = vpack.c.b16 %v2110, %v2106
    %v2343 = vpack.c.b16 %v2111, %v2107
    %v2344 = vpack.c.b16 %v2112, %v2108
    %v2345 = vpack.c.b16 %v2117, %v2113
    %v2346 = vpack.c.b16 %v2118, %v2114
    %v2347 = vpack.c.b16 %v2119, %v2115
    %v2348 = vpack.c.b16 %v2120, %v2116
    %v2349 = vpack.c.b16 %v2125, %v2121
    %v2350 = vpack.c.b16 %v2126, %v2122
    %v2351 = vpack.c.b16 %v2127, %v2123
    %v2352 = vpack.c.b16 %v2128, %v2124
    %v2353 = vpack.c.b16 %v2133, %v2129
    %v2354 = vpack.c.b16 %v2134, %v2130
    %v2355 = vpack.c.b16 %v2135, %v2131
    %v2356 = vpack.c.b16 %v2136, %v2132
    %v2357 = vpack.c.b16 %v2141, %v2137
    %v2358 = vpack.c.b16 %v2142, %v2138
    %v2359 = vpack.c.b16 %v2143, %v2139
    %v2360 = vpack.c.b16 %v2144, %v2140
    %v2361 = vpack.c.b16 %v2149, %v2145
    %v2362 = vpack.c.b16 %v2150, %v2146
    %v2363 = vpack.c.b16 %v2151, %v2147
    %v2364 = vpack.c.b16 %v2152, %v2148
    %v2365 = vpack.c.b16 %v2157, %v2153
    %v2366 = vpack.c.b16 %v2158, %v2154
    %v2367 = vpack.c.b16 %v2159, %v2155
    %v2368 = vpack.c.b16 %v2160, %v2156
    %v2369 = vpack.c.b16 %v2165, %v2161
    %v2370 = vpack.c.b16 %v2166, %v2162
    %v2371 = vpack.c.b16 %v2167, %v2163
    %v2372 = vpack.c.b16 %v2168, %v2164
    %v2373 = vpack.c.b16 %v2173, %v2169
    %v2374 = vpack.c.b16 %v2174, %v2170
    %v2375 = vpack.c.b16 %v2175, %v2171
    %v2376 = vpack.c.b16 %v2176, %v2172
    %v2377 = vpack.c.b16 %v2181, %v2177
    %v2378 = vpack.c.b16 %v2182, %v2178
    %v2379 = vpack.c.b16 %v2183, %v2179
    %v2380 = vpack.c.b16 %v2184, %v2180
    %v2381 = vpack.c.b16 %v2189, %v2185
    %v2382 = vpack.c.b16 %v2190, %v2186
    %v2383 = vpack.c.b16 %v2191, %v2187
    %v2384 = vpack.c.b16 %v2192, %v2188
    %v2385 = vpack.c.b16 %v2197, %v2193
    %v2386 = vpack.c.b16 %v2198, %v2194
    %v2387 = vpack.c.b16 %v2199, %v2195
    %v2388 = vpack.c.b16 %v2200, %v2196
    %v2389 = vpack.c.b16 %v2205, %v2201
    %v2390 = vpack.c.b16 %v2206, %v2202
    %v2391 = vpack.c.b16 %v2207, %v2203
    %v2392 = vpack.c.b16 %v2208, %v2204
    %v2393 = vpack.c.b16 %v2213, %v2209
    %v2394 = vpack.c.b16 %v2214, %v2210
    %v2395 = vpack.c.b16 %v2215, %v2211
    %v2396 = vpack.c.b16 %v2216, %v2212
    %v2397 = vpack.c.b16 %v2221, %v2217
    %v2398 = vpack.c.b16 %v2222, %v2218
    %v2399 = vpack.c.b16 %v2223, %v2219
    %v2400 = vpack.c.b16 %v2224, %v2220
    %v2401 = vpack.c.b16 %v2229, %v2225
    %v2402 = vpack.c.b16 %v2230, %v2226
    %v2403 = vpack.c.b16 %v2231, %v2227
    %v2404 = vpack.c.b16 %v2232, %v2228
    %v2405 = vpack.c.b16 %v2237, %v2233
    %v2406 = vpack.c.b16 %v2238, %v2234
    %v2407 = vpack.c.b16 %v2239, %v2235
    %v2408 = vpack.c.b16 %v2240, %v2236
    %v2409 = vpack.c.b16 %v2245, %v2241
    %v2410 = vpack.c.b16 %v2246, %v2242
    %v2411 = vpack.c.b16 %v2247, %v2243
    %v2412 = vpack.c.b16 %v2248, %v2244
    %v2413 = vpack.c.b16 %v2253, %v2249
    %v2414 = vpack.c.b16 %v2254, %v2250
    %v2415 = vpack.c.b16 %v2255, %v2251
    %v2416 = vpack.c.b16 %v2256, %v2252
    %v2417 = vpack.c.b16 %v2261, %v2257
    %v2418 = vpack.c.b16 %v2262, %v2258
    %v2419 = vpack.c.b16 %v2263, %v2259
    %v2420 = vpack.c.b16 %v2264, %v2260
    %v2421 = vpack.c.b16 %v2269, %v2265
    %v2422 = vpack.c.b16 %v2270, %v2266
    %v2423 = vpack.c.b16 %v2271, %v2267
    %v2424 = vpack.c.b16 %v2272, %v2268
    %v2425 = vpack.c.b16 %v2277, %v2273
    %v2426 = vpack.c.b16 %v2278, %v2274
    %v2427 = vpack.c.b16 %v2279, %v2275
    %v2428 = vpack.c.b16 %v2280, %v2276
    %v2429 = vpack.c.b16 %v2285, %v2281
    %v2430 = vpack.c.b16 %v2286, %v2282
    %v2431 = vpack.c.b16 %v2287, %v2283
    %v2432 = vpack.c.b16 %v2288, %v2284
    %v2433 = vpack.c.b16 %v2293, %v2289
    %v2434 = vpack.c.b16 %v2294, %v2290
    %v2435 = vpack.c.b16 %v2295, %v2291
    %v2436 = vpack.c.b16 %v2296, %v2292
    %v2437 = vpack.c.b16 %v2301, %v2297
    %v2438 = vpack.c.b16 %v2302, %v2298
    %v2439 = vpack.c.b16 %v2303, %v2299
    %v2440 = vpack.c.b16 %v2304, %v2300
    %v2441 = vpack.c.b16 %v2309, %v2305
    %v2442 = vpack.c.b16 %v2310, %v2306
    %v2443 = vpack.c.b16 %v2311, %v2307
    %v2444 = vpack.c.b16 %v2312, %v2308
    %v2445 = vpack.c.b16 %v2317, %v2313
    %v2446 = vpack.c.b16 %v2318, %v2314
    %v2447 = vpack.c.b16 %v2319, %v2315
    %v2448 = vpack.c.b16 %v2320, %v2316
    %2577 = vmatprep.subr.bf16.mxu0 %v2322
    %2578 = vmatpush1.bf16.msra.mxu0 %v2321
    %2579 = vmatprep.subr.bf16.mxu0 %v2326
    %2580 = vmatpush1.bf16.msra.mxu0 %v2325
    %2581 = vmatprep.subr.bf16.mxu0 %v2330
    %2582 = vmatpush1.bf16.msra.mxu0 %v2329
    %2583 = vmatprep.subr.bf16.mxu0 %v2334
    %2584 = vmatpush1.bf16.msra.mxu0 %v2333
    %2585 = vmatprep.subr.bf16.mxu0 %v2338
    %2586 = vmatpush1.bf16.msra.mxu0 %v2337
    %2587 = vmatprep.subr.bf16.mxu0 %v2342
    %2588 = vmatpush1.bf16.msra.mxu0 %v2341
    %2589 = vmatprep.subr.bf16.mxu0 %v2346
    %2590 = vmatpush1.bf16.msra.mxu0 %v2345
    %2591 = vmatprep.subr.bf16.mxu0 %v2350
    %2592 = vmatpush1.bf16.msra.mxu0 %v2349
    %2593 = vmatprep.subr.bf16.mxu0 %v2354
    %2594 = vmatpush1.bf16.msra.mxu0 %v2353
    %2595 = vmatprep.subr.bf16.mxu0 %v2358
    %2596 = vmatpush1.bf16.msra.mxu0 %v2357
    %2597 = vmatprep.subr.bf16.mxu0 %v2362
    %2598 = vmatpush1.bf16.msra.mxu0 %v2361
    %2599 = vmatprep.subr.bf16.mxu0 %v2366
    %2600 = vmatpush1.bf16.msra.mxu0 %v2365
    %2601 = vmatprep.subr.bf16.mxu0 %v2370
    %2602 = vmatpush1.bf16.msra.mxu0 %v2369
    %2603 = vmatprep.subr.bf16.mxu0 %v2374
    %2604 = vmatpush1.bf16.msra.mxu0 %v2373
    %2605 = vmatprep.subr.bf16.mxu0 %v2378
    %2606 = vmatpush1.bf16.msra.mxu0 %v2377
    %2607 = vmatprep.subr.bf16.mxu0 %v2382
    %2608 = vmatpush1.bf16.msra.mxu0 %v2381
    %2609 = vmatprep.mubr.bf16.mxu0 %v1784
    %2610 = vmatmul.mubr.bf16.gmra.mrb[0].mxu0 %v1783
    %v2611 = vpop.f32.mrb[0].mxu0
    %v2612 = vadd.f32 %v1920, %v2611
    %v2613 = vpop.f32.mrb[0].mxu0
    %v2614 = vadd.f32 %v1924, %v2613
    %v2615 = vpop.f32.mrb[0].mxu0
    %v2616 = vpop.f32.mrb[0].mxu0
    %2617 = vdwg.mxu0
    %2618 = vmatprep.subr.bf16.mxu0 %v2386
    %2619 = vmatpush1.bf16.msra.mxu0 %v2385
    %2620 = vmatprep.subr.bf16.mxu0 %v2390
    %2621 = vmatpush1.bf16.msra.mxu0 %v2389
    %2622 = vmatprep.subr.bf16.mxu0 %v2394
    %2623 = vmatpush1.bf16.msra.mxu0 %v2393
    %2624 = vmatprep.subr.bf16.mxu0 %v2398
    %2625 = vmatpush1.bf16.msra.mxu0 %v2397
    %2626 = vmatprep.subr.bf16.mxu0 %v2402
    %2627 = vmatpush1.bf16.msra.mxu0 %v2401
    %2628 = vmatprep.subr.bf16.mxu0 %v2406
    %2629 = vmatpush1.bf16.msra.mxu0 %v2405
    %2630 = vmatprep.subr.bf16.mxu0 %v2410
    %2631 = vmatpush1.bf16.msra.mxu0 %v2409
    %2632 = vmatprep.subr.bf16.mxu0 %v2414
    %2633 = vmatpush1.bf16.msra.mxu0 %v2413
    %2634 = vmatprep.subr.bf16.mxu0 %v2418
    %2635 = vmatpush1.bf16.msra.mxu0 %v2417
    %2636 = vmatprep.subr.bf16.mxu0 %v2422
    %2637 = vmatpush1.bf16.msra.mxu0 %v2421
    %2638 = vmatprep.subr.bf16.mxu0 %v2426
    %2639 = vmatpush1.bf16.msra.mxu0 %v2425
    %2640 = vmatprep.subr.bf16.mxu0 %v2430
    %2641 = vmatpush1.bf16.msra.mxu0 %v2429
    %2642 = vmatprep.subr.bf16.mxu0 %v2434
    %2643 = vmatpush1.bf16.msra.mxu0 %v2433
    %2644 = vmatprep.subr.bf16.mxu0 %v2438
    %2645 = vmatpush1.bf16.msra.mxu0 %v2437
    %2646 = vmatprep.subr.bf16.mxu0 %v2442
    %2647 = vmatpush1.bf16.msra.mxu0 %v2441
    %2648 = vmatprep.subr.bf16.mxu0 %v2446
    %2649 = vmatpush1.bf16.msra.mxu0 %v2445
    %2650 = vmatprep.mubr.bf16.mxu0 %v1786
    %2651 = vmatmul.mubr.bf16.gmra.mrb[0].mxu0 %v1785
    %v2652 = vpop.f32.mrb[0].mxu0
    %v2653 = vadd.f32 %v2612, %v2652
    %v2654 = vpop.f32.mrb[0].mxu0
    %v2655 = vadd.f32 %v2614, %v2654
    %v2656 = vpop.f32.mrb[0].mxu0
    %v2657 = vpop.f32.mrb[0].mxu0
    %2658 = vdwg.mxu0
    %2659 = vmatprep.subr.bf16.mxu0 %v2324
    %2660 = vmatpush1.bf16.msra.mxu0 %v2323
    %2661 = vmatprep.subr.bf16.mxu0 %v2328
    %2662 = vmatpush1.bf16.msra.mxu0 %v2327
    %2663 = vmatprep.subr.bf16.mxu0 %v2332
    %2664 = vmatpush1.bf16.msra.mxu0 %v2331
    %2665 = vmatprep.subr.bf16.mxu0 %v2336
    %2666 = vmatpush1.bf16.msra.mxu0 %v2335
    %2667 = vmatprep.subr.bf16.mxu0 %v2340
    %2668 = vmatpush1.bf16.msra.mxu0 %v2339
    %2669 = vmatprep.subr.bf16.mxu0 %v2344
    %2670 = vmatpush1.bf16.msra.mxu0 %v2343
    %2671 = vmatprep.subr.bf16.mxu0 %v2348
    %2672 = vmatpush1.bf16.msra.mxu0 %v2347
    %2673 = vmatprep.subr.bf16.mxu0 %v2352
    %2674 = vmatpush1.bf16.msra.mxu0 %v2351
    %2675 = vmatprep.subr.bf16.mxu0 %v2356
    %2676 = vmatpush1.bf16.msra.mxu0 %v2355
    %2677 = vmatprep.subr.bf16.mxu0 %v2360
    %2678 = vmatpush1.bf16.msra.mxu0 %v2359
    %2679 = vmatprep.subr.bf16.mxu0 %v2364
    %2680 = vmatpush1.bf16.msra.mxu0 %v2363
    %2681 = vmatprep.subr.bf16.mxu0 %v2368
    %2682 = vmatpush1.bf16.msra.mxu0 %v2367
    %2683 = vmatprep.subr.bf16.mxu0 %v2372
    %2684 = vmatpush1.bf16.msra.mxu0 %v2371
    %2685 = vmatprep.subr.bf16.mxu0 %v2376
    %2686 = vmatpush1.bf16.msra.mxu0 %v2375
    %2687 = vmatprep.subr.bf16.mxu0 %v2380
    %2688 = vmatpush1.bf16.msra.mxu0 %v2379
    %2689 = vmatprep.subr.bf16.mxu0 %v2384
    %2690 = vmatpush1.bf16.msra.mxu0 %v2383
    %2691 = vmatprep.mubr.bf16.mxu0 %v1784
    %2692 = vmatmul.mubr.bf16.gmra.mrb[0].mxu0 %v1783
    %v2693 = vpop.f32.mrb[0].mxu0
    %v2694 = vadd.f32 %v1928, %v2693
    %v2695 = vpop.f32.mrb[0].mxu0
    %v2696 = vadd.f32 %v1932, %v2695
    %v2697 = vpop.f32.mrb[0].mxu0
    %v2698 = vpop.f32.mrb[0].mxu0
    %2699 = vdwg.mxu0
    %2700 = vmatprep.subr.bf16.mxu0 %v2388
    %2701 = vmatpush1.bf16.msra.mxu0 %v2387
    %2702 = vmatprep.subr.bf16.mxu0 %v2392
    %2703 = vmatpush1.bf16.msra.mxu0 %v2391
    %2704 = vmatprep.subr.bf16.mxu0 %v2396
    %2705 = vmatpush1.bf16.msra.mxu0 %v2395
    %2706 = vmatprep.subr.bf16.mxu0 %v2400
    %2707 = vmatpush1.bf16.msra.mxu0 %v2399
    %2708 = vmatprep.subr.bf16.mxu0 %v2404
    %2709 = vmatpush1.bf16.msra.mxu0 %v2403
    %2710 = vmatprep.subr.bf16.mxu0 %v2408
    %2711 = vmatpush1.bf16.msra.mxu0 %v2407
    %2712 = vmatprep.subr.bf16.mxu0 %v2412
    %2713 = vmatpush1.bf16.msra.mxu0 %v2411
    %2714 = vmatprep.subr.bf16.mxu0 %v2416
    %2715 = vmatpush1.bf16.msra.mxu0 %v2415
    %2716 = vmatprep.subr.bf16.mxu0 %v2420
    %2717 = vmatpush1.bf16.msra.mxu0 %v2419
    %2718 = vmatprep.subr.bf16.mxu0 %v2424
    %2719 = vmatpush1.bf16.msra.mxu0 %v2423
    %2720 = vmatprep.subr.bf16.mxu0 %v2428
    %2721 = vmatpush1.bf16.msra.mxu0 %v2427
    %2722 = vmatprep.subr.bf16.mxu0 %v2432
    %2723 = vmatpush1.bf16.msra.mxu0 %v2431
    %2724 = vmatprep.subr.bf16.mxu0 %v2436
    %2725 = vmatpush1.bf16.msra.mxu0 %v2435
    %2726 = vmatprep.subr.bf16.mxu0 %v2440
    %2727 = vmatpush1.bf16.msra.mxu0 %v2439
    %2728 = vmatprep.subr.bf16.mxu0 %v2444
    %2729 = vmatpush1.bf16.msra.mxu0 %v2443
    %2730 = vmatprep.subr.bf16.mxu0 %v2448
    %2731 = vmatpush1.bf16.msra.mxu0 %v2447
    %2732 = vmatprep.mubr.bf16.mxu0 %v1786
    %2733 = vmatmul.mubr.bf16.gmra.mrb[0].mxu0 %v1785
    %v2734 = vpop.f32.mrb[0].mxu0
    %v2735 = vadd.f32 %v2694, %v2734
    %v2736 = vpop.f32.mrb[0].mxu0
    %v2737 = vadd.f32 %v2696, %v2736
    %v2738 = vpop.f32.mrb[0].mxu0
    %v2739 = vpop.f32.mrb[0].mxu0
    %2740 = vdwg.mxu0
    %v2741 = vmax.f32 %v2653, 0.0
    %v2742 = vmax.f32 %v2655, 0.0
    %v2743 = vmax.f32 %v2735, 0.0
    %v2744 = vmax.f32 %v2737, 0.0
    %v2745 = vpack.c.bf16 %v2741, %v2741
    %v2746 = vpack.c.bf16 %v2742, %v2742
    %v2747 = vpack.c.bf16 %v2743, %v2743
    %v2748 = vpack.c.bf16 %v2744, %v2744
    %v2749 = vld [vmem:[%s5] sm:$0xf]
    %v2750 = vld [vmem:[%s5 + $0x4] sm:$0xf]
    %v2751 = vld [vmem:[%s5 + $0x8] sm:$0xf]
    %v2752 = vld [vmem:[%s5 + $0xc] sm:$0xf]
    %v2753 = vld [vmem:[%s5 + $0x10] sm:$0xf]
    %v2754 = vld [vmem:[%s5 + $0x14] sm:$0xf]
    %v2755 = vld [vmem:[%s5 + $0x18] sm:$0xf]
    %v2756 = vld [vmem:[%s5 + $0x1c] sm:$0xf]
    %v2757 = vld [vmem:[%s5 + $0x20] sm:$0xf]
    %v2758 = vld [vmem:[%s5 + $0x24] sm:$0xf]
    %v2759 = vld [vmem:[%s5 + $0x28] sm:$0xf]
    %v2760 = vld [vmem:[%s5 + $0x2c] sm:$0xf]
    %v2761 = vld [vmem:[%s5 + $0x30] sm:$0xf]
    %v2762 = vld [vmem:[%s5 + $0x34] sm:$0xf]
    %v2763 = vld [vmem:[%s5 + $0x38] sm:$0xf]
    %v2764 = vld [vmem:[%s5 + $0x3c] sm:$0xf]
    %v2765 = vld [vmem:[%s5 + $0x40] sm:$0xf]
    %v2766 = vld [vmem:[%s5 + $0x44] sm:$0xf]
    %v2767 = vld [vmem:[%s5 + $0x48] sm:$0xf]
    %v2768 = vld [vmem:[%s5 + $0x4c] sm:$0xf]
    %v2769 = vld [vmem:[%s5 + $0x50] sm:$0xf]
    %v2770 = vld [vmem:[%s5 + $0x54] sm:$0xf]
    %v2771 = vld [vmem:[%s5 + $0x58] sm:$0xf]
    %v2772 = vld [vmem:[%s5 + $0x5c] sm:$0xf]
    %v2773 = vld [vmem:[%s5 + $0x60] sm:$0xf]
    %v2774 = vld [vmem:[%s5 + $0x64] sm:$0xf]
    %v2775 = vld [vmem:[%s5 + $0x68] sm:$0xf]
    %v2776 = vld [vmem:[%s5 + $0x6c] sm:$0xf]
    %v2777 = vld [vmem:[%s5 + $0x70] sm:$0xf]
    %v2778 = vld [vmem:[%s5 + $0x74] sm:$0xf]
    %v2779 = vld [vmem:[%s5 + $0x78] sm:$0xf]
    %v2780 = vld [vmem:[%s5 + $0x7c] sm:$0xf]
    %v2781 = vld [vmem:[%s5 + $0x80] sm:$0xf]
    %v2782 = vld [vmem:[%s5 + $0x84] sm:$0xf]
    %v2783 = vld [vmem:[%s5 + $0x88] sm:$0xf]
    %v2784 = vld [vmem:[%s5 + $0x8c] sm:$0xf]
    %v2785 = vld [vmem:[%s5 + $0x90] sm:$0xf]
    %v2786 = vld [vmem:[%s5 + $0x94] sm:$0xf]
    %v2787 = vld [vmem:[%s5 + $0x98] sm:$0xf]
    %v2788 = vld [vmem:[%s5 + $0x9c] sm:$0xf]
    %v2789 = vld [vmem:[%s5 + $0xa0] sm:$0xf]
    %v2790 = vld [vmem:[%s5 + $0xa4] sm:$0xf]
    %v2791 = vld [vmem:[%s5 + $0xa8] sm:$0xf]
    %v2792 = vld [vmem:[%s5 + $0xac] sm:$0xf]
    %v2793 = vld [vmem:[%s5 + $0xb0] sm:$0xf]
    %v2794 = vld [vmem:[%s5 + $0xb4] sm:$0xf]
    %v2795 = vld [vmem:[%s5 + $0xb8] sm:$0xf]
    %v2796 = vld [vmem:[%s5 + $0xbc] sm:$0xf]
    %v2797 = vld [vmem:[%s5 + $0xc0] sm:$0xf]
    %v2798 = vld [vmem:[%s5 + $0xc4] sm:$0xf]
    %v2799 = vld [vmem:[%s5 + $0xc8] sm:$0xf]
    %v2800 = vld [vmem:[%s5 + $0xcc] sm:$0xf]
    %v2801 = vld [vmem:[%s5 + $0xd0] sm:$0xf]
    %v2802 = vld [vmem:[%s5 + $0xd4] sm:$0xf]
    %v2803 = vld [vmem:[%s5 + $0xd8] sm:$0xf]
    %v2804 = vld [vmem:[%s5 + $0xdc] sm:$0xf]
    %v2805 = vld [vmem:[%s5 + $0xe0] sm:$0xf]
    %v2806 = vld [vmem:[%s5 + $0xe4] sm:$0xf]
    %v2807 = vld [vmem:[%s5 + $0xe8] sm:$0xf]
    %v2808 = vld [vmem:[%s5 + $0xec] sm:$0xf]
    %v2809 = vld [vmem:[%s5 + $0xf0] sm:$0xf]
    %v2810 = vld [vmem:[%s5 + $0xf4] sm:$0xf]
    %v2811 = vld [vmem:[%s5 + $0xf8] sm:$0xf]
    %v2812 = vld [vmem:[%s5 + $0xfc] sm:$0xf]
    %v2813 = vld [vmem:[%s6] sm:$0x1]
    %v2815 = vlaneseq
    %v2816 = vshrl.u32 %v2815, 7
    %v2817 = vsub.s32 0, %v2816
    %v2818 = vrot.slane %v2813, %v2817
    %v2884 = vunpack.c.l.b16 %v2749
    %v2885 = vunpack.c.l.b16 %v2750
    %v2886 = vunpack.c.l.b16 %v2751
    %v2887 = vunpack.c.l.b16 %v2752
    %v2888 = vunpack.c.l.b16 %v2753
    %v2889 = vunpack.c.l.b16 %v2754
    %v2890 = vunpack.c.l.b16 %v2755
    %v2891 = vunpack.c.l.b16 %v2756
    %v2892 = vunpack.c.l.b16 %v2757
    %v2893 = vunpack.c.l.b16 %v2758
    %v2894 = vunpack.c.l.b16 %v2759
    %v2895 = vunpack.c.l.b16 %v2760
    %v2896 = vunpack.c.l.b16 %v2761
    %v2897 = vunpack.c.l.b16 %v2762
    %v2898 = vunpack.c.l.b16 %v2763
    %v2899 = vunpack.c.l.b16 %v2764
    %v2900 = vunpack.c.l.b16 %v2765
    %v2901 = vunpack.c.l.b16 %v2766
    %v2902 = vunpack.c.l.b16 %v2767
    %v2903 = vunpack.c.l.b16 %v2768
    %v2904 = vunpack.c.l.b16 %v2769
    %v2905 = vunpack.c.l.b16 %v2770
    %v2906 = vunpack.c.l.b16 %v2771
    %v2907 = vunpack.c.l.b16 %v2772
    %v2908 = vunpack.c.l.b16 %v2773
    %v2909 = vunpack.c.l.b16 %v2774
    %v2910 = vunpack.c.l.b16 %v2775
    %v2911 = vunpack.c.l.b16 %v2776
    %v2912 = vunpack.c.l.b16 %v2777
    %v2913 = vunpack.c.l.b16 %v2778
    %v2914 = vunpack.c.l.b16 %v2779
    %v2915 = vunpack.c.l.b16 %v2780
    %v2916 = vunpack.c.l.b16 %v2781
    %v2917 = vunpack.c.l.b16 %v2782
    %v2918 = vunpack.c.l.b16 %v2783
    %v2919 = vunpack.c.l.b16 %v2784
    %v2920 = vunpack.c.l.b16 %v2785
    %v2921 = vunpack.c.l.b16 %v2786
    %v2922 = vunpack.c.l.b16 %v2787
    %v2923 = vunpack.c.l.b16 %v2788
    %v2924 = vunpack.c.l.b16 %v2789
    %v2925 = vunpack.c.l.b16 %v2790
    %v2926 = vunpack.c.l.b16 %v2791
    %v2927 = vunpack.c.l.b16 %v2792
    %v2928 = vunpack.c.l.b16 %v2793
    %v2929 = vunpack.c.l.b16 %v2794
    %v2930 = vunpack.c.l.b16 %v2795
    %v2931 = vunpack.c.l.b16 %v2796
    %v2932 = vunpack.c.l.b16 %v2797
    %v2933 = vunpack.c.l.b16 %v2798
    %v2934 = vunpack.c.l.b16 %v2799
    %v2935 = vunpack.c.l.b16 %v2800
    %v2936 = vunpack.c.l.b16 %v2801
    %v2937 = vunpack.c.l.b16 %v2802
    %v2938 = vunpack.c.l.b16 %v2803
    %v2939 = vunpack.c.l.b16 %v2804
    %v2940 = vunpack.c.l.b16 %v2805
    %v2941 = vunpack.c.l.b16 %v2806
    %v2942 = vunpack.c.l.b16 %v2807
    %v2943 = vunpack.c.l.b16 %v2808
    %v2944 = vunpack.c.l.b16 %v2809
    %v2945 = vunpack.c.l.b16 %v2810
    %v2946 = vunpack.c.l.b16 %v2811
    %v2947 = vunpack.c.l.b16 %v2812
    %v2948 = vpack.c.b16 %v2885, %v2884
    %v2949 = vpack.c.b16 %v2887, %v2886
    %v2950 = vpack.c.b16 %v2889, %v2888
    %v2951 = vpack.c.b16 %v2891, %v2890
    %v2952 = vpack.c.b16 %v2893, %v2892
    %v2953 = vpack.c.b16 %v2895, %v2894
    %v2954 = vpack.c.b16 %v2897, %v2896
    %v2955 = vpack.c.b16 %v2899, %v2898
    %v2956 = vpack.c.b16 %v2901, %v2900
    %v2957 = vpack.c.b16 %v2903, %v2902
    %v2958 = vpack.c.b16 %v2905, %v2904
    %v2959 = vpack.c.b16 %v2907, %v2906
    %v2960 = vpack.c.b16 %v2909, %v2908
    %v2961 = vpack.c.b16 %v2911, %v2910
    %v2962 = vpack.c.b16 %v2913, %v2912
    %v2963 = vpack.c.b16 %v2915, %v2914
    %v2964 = vpack.c.b16 %v2917, %v2916
    %v2965 = vpack.c.b16 %v2919, %v2918
    %v2966 = vpack.c.b16 %v2921, %v2920
    %v2967 = vpack.c.b16 %v2923, %v2922
    %v2968 = vpack.c.b16 %v2925, %v2924
    %v2969 = vpack.c.b16 %v2927, %v2926
    %v2970 = vpack.c.b16 %v2929, %v2928
    %v2971 = vpack.c.b16 %v2931, %v2930
    %v2972 = vpack.c.b16 %v2933, %v2932
    %v2973 = vpack.c.b16 %v2935, %v2934
    %v2974 = vpack.c.b16 %v2937, %v2936
    %v2975 = vpack.c.b16 %v2939, %v2938
    %v2976 = vpack.c.b16 %v2941, %v2940
    %v2977 = vpack.c.b16 %v2943, %v2942
    %v2978 = vpack.c.b16 %v2945, %v2944
    %v2979 = vpack.c.b16 %v2947, %v2946
    %3012 = vmatprep.subr.bf16.mxu0 0
    %3013 = vmatpush1.bf16.msra.mxu0 %v2948
    %3014 = vmatprep.subr.bf16.mxu0 0
    %3015 = vmatpush1.bf16.msra.mxu0 %v2949
    %3016 = vmatprep.subr.bf16.mxu0 0
    %3017 = vmatpush1.bf16.msra.mxu0 %v2950
    %3018 = vmatprep.subr.bf16.mxu0 0
    %3019 = vmatpush1.bf16.msra.mxu0 %v2951
    %3020 = vmatprep.subr.bf16.mxu0 0
    %3021 = vmatpush1.bf16.msra.mxu0 %v2952
    %3022 = vmatprep.subr.bf16.mxu0 0
    %3023 = vmatpush1.bf16.msra.mxu0 %v2953
    %3024 = vmatprep.subr.bf16.mxu0 0
    %3025 = vmatpush1.bf16.msra.mxu0 %v2954
    %3026 = vmatprep.subr.bf16.mxu0 0
    %3027 = vmatpush1.bf16.msra.mxu0 %v2955
    %3028 = vmatprep.subr.bf16.mxu0 0
    %3029 = vmatpush1.bf16.msra.mxu0 %v2956
    %3030 = vmatprep.subr.bf16.mxu0 0
    %3031 = vmatpush1.bf16.msra.mxu0 %v2957
    %3032 = vmatprep.subr.bf16.mxu0 0
    %3033 = vmatpush1.bf16.msra.mxu0 %v2958
    %3034 = vmatprep.subr.bf16.mxu0 0
    %3035 = vmatpush1.bf16.msra.mxu0 %v2959
    %3036 = vmatprep.subr.bf16.mxu0 0
    %3037 = vmatpush1.bf16.msra.mxu0 %v2960
    %3038 = vmatprep.subr.bf16.mxu0 0
    %3039 = vmatpush1.bf16.msra.mxu0 %v2961
    %3040 = vmatprep.subr.bf16.mxu0 0
    %3041 = vmatpush1.bf16.msra.mxu0 %v2962
    %3042 = vmatprep.subr.bf16.mxu0 0
    %3043 = vmatpush1.bf16.msra.mxu0 %v2963
    %3044 = vmatprep.mubr.bf16.mxu0 %v2746
    %3045 = vmatmul.mubr.bf16.gmra.mrb[0].mxu0 %v2745
    %v3046 = vpop.f32.mrb[0].mxu0
    %v3047 = vadd.f32 %v2818, %v3046
    %v3048 = vpop.f32.mrb[0].mxu0
    %v3049 = vpop.f32.mrb[0].mxu0
    %v3050 = vpop.f32.mrb[0].mxu0
    %3051 = vdwg.mxu0
    %3052 = vmatprep.subr.bf16.mxu0 0
    %3053 = vmatpush1.bf16.msra.mxu0 %v2964
    %3054 = vmatprep.subr.bf16.mxu0 0
    %3055 = vmatpush1.bf16.msra.mxu0 %v2965
    %3056 = vmatprep.subr.bf16.mxu0 0
    %3057 = vmatpush1.bf16.msra.mxu0 %v2966
    %3058 = vmatprep.subr.bf16.mxu0 0
    %3059 = vmatpush1.bf16.msra.mxu0 %v2967
    %3060 = vmatprep.subr.bf16.mxu0 0
    %3061 = vmatpush1.bf16.msra.mxu0 %v2968
    %3062 = vmatprep.subr.bf16.mxu0 0
    %3063 = vmatpush1.bf16.msra.mxu0 %v2969
    %3064 = vmatprep.subr.bf16.mxu0 0
    %3065 = vmatpush1.bf16.msra.mxu0 %v2970
    %3066 = vmatprep.subr.bf16.mxu0 0
    %3067 = vmatpush1.bf16.msra.mxu0 %v2971
    %3068 = vmatprep.subr.bf16.mxu0 0
    %3069 = vmatpush1.bf16.msra.mxu0 %v2972
    %3070 = vmatprep.subr.bf16.mxu0 0
    %3071 = vmatpush1.bf16.msra.mxu0 %v2973
    %3072 = vmatprep.subr.bf16.mxu0 0
    %3073 = vmatpush1.bf16.msra.mxu0 %v2974
    %3074 = vmatprep.subr.bf16.mxu0 0
    %3075 = vmatpush1.bf16.msra.mxu0 %v2975
    %3076 = vmatprep.subr.bf16.mxu0 0
    %3077 = vmatpush1.bf16.msra.mxu0 %v2976
    %3078 = vmatprep.subr.bf16.mxu0 0
    %3079 = vmatpush1.bf16.msra.mxu0 %v2977
    %3080 = vmatprep.subr.bf16.mxu0 0
    %3081 = vmatpush1.bf16.msra.mxu0 %v2978
    %3082 = vmatprep.subr.bf16.mxu0 0
    %3083 = vmatpush1.bf16.msra.mxu0 %v2979
    %3084 = vmatprep.mubr.bf16.mxu0 %v2748
    %3085 = vmatmul.mubr.bf16.gmra.mrb[0].mxu0 %v2747
    %v3086 = vpop.f32.mrb[0].mxu0
    %v3087 = vadd.f32 %v3047, %v3086
    %v3088 = vpop.f32.mrb[0].mxu0
    %v3089 = vpop.f32.mrb[0].mxu0
    %v3090 = vpop.f32.mrb[0].mxu0
    %3091 = vdwg.mxu0
    %3092 = vst [vmem:[#allocation7] sm:$0xff] %v3087
    // Predicated region
    $region38: #{mlp_forward.1} parent=1 // pred_check
      _
    $region39: #{mlp_forward.1} parent=1 // pred_check_branch
      %3094 = sbr.rel (0) target = $region41
    $region40: #{mlp_forward.1} parent=1 // pred_region
      %s3096 = ssub.s32 128, 128
      %3097 = vsyncadd [#allocation4], %s3096
      %s3099 = sshll.u32 [#allocation7], 4
      %s3100 = int_to_ptr.vmem [resolvable:$true] %s3099
      %3102 = dma.vmem_to_hbm [thread:$0]  %s3100, 128, %s7, [#allocation4]
    $region41: #{mlp_forward.1} parent=1 // pred_fallthru
      _
    // Predicated region
    $region42: #{mlp_forward.1} parent=1 // pred_check
      _
    $region43: #{mlp_forward.1} parent=1 // pred_check_branch
      %3104 = sbr.rel (0) target = $region45
    $region44: #{mlp_forward.1} parent=1 // pred_region
      %3105 = dma.done [#allocation4], 128
    $region45: #{mlp_forward.1} parent=1 // pred_fallthru
      _
    %3106 = vsyncpa [#allocation3], 1
    %3107 = vsyncpa [#allocation6], 1
    %3108 = vsyncpa [#allocation4], 1

</llo_original>
